<compile_context>
chip_gen: v7x
topology: tpu7x:2x2x1
jax: 0.10.0
libtpu: 0.0.40
codegen_flags: <defaults>
</compile_context>

<pallas_src>
import functools

import jax
import jax.numpy as jnp
from jax.experimental import pallas as pl
from jax.experimental.pallas import tpu as pltpu


def _tebn_fused_kernel(x_ref, w_ref, b_ref, pg_ref, pb_ref, o_ref, y_ref,
                       *, N, T, Cin, Cout, H, W, KH, KW, pad, eps):
    """Fused Conv2d + BatchNorm3d (training-mode stats) + per-timestep scale.

    x_ref : (B, Hp, Wp, Cin)    bf16 padded NHWC input, B = N*T
    w_ref : (KH*KW, Cout, Cin)  bf16 conv weight, one (Cout, Cin) matrix per tap
    b_ref : (Cout, 1)           f32  conv bias
    pg_ref: (T, Cout, 1)        f32  p[t] * gamma
    pb_ref: (T, Cout, 1)        f32  p[t] * beta
    o_ref : (N, T, Cout, Ho*Wo) f32  output, channel-major with Ho*Wo on the lane axis
    y_ref : (B, Cout, Ho*Wo)    f32  VMEM scratch holding the conv output
    """
    B = N * T
    Hp, Wp = H + 2 * pad, W + 2 * pad
    Ho, Wo = Hp - KH + 1, Wp - KW + 1          # stride == 1
    HoWo = Ho * Wo
    contract = (((1,), (1,)), ((), ()))        # contract Cin of both operands (q.k^T style)

    bias = b_ref[...]                          # (Cout, 1), loaded once (hoisted)

    # ---- phase 1: conv.  9 MXU dots per frame; each result (Cout, 256) is lane-dense.
    def conv_one_image(b, carry):
        acc = jnp.zeros((Cout, HoWo), jnp.float32)
        for kh in range(KH):                   # 3x3 taps fully unrolled -> 9 dots/frame
            for kw in range(KW):
                slab = x_ref[b, kh:kh + Ho, kw:kw + Wo, :]   # (Ho, Wo, Cin) bf16
                slab = slab.reshape(HoWo, Cin)               # minor dim unchanged (free)
                acc = acc + jax.lax.dot_general(
                    w_ref[kh * KW + kw], slab, contract,
                    preferred_element_type=jnp.float32)
        y_ref[b] = acc + bias                  # bias added once per frame
        return carry

    jax.lax.fori_loop(0, B, conv_one_image, 0)

    # ---- phase 2: per-channel batch statistics over (B, Ho*Wo), two-pass (centered var).
    y = y_ref[...]                                                          # (B, Cout, HoWo)
    inv_cnt = 1.0 / float(B * HoWo)
    mean = jnp.sum(jnp.sum(y, axis=2, keepdims=True), axis=0) * inv_cnt     # (Cout, 1)
    d = y - mean                                                            # (B, Cout, HoWo)
    var = jnp.sum(jnp.sum(d * d, axis=2, keepdims=True), axis=0) * inv_cnt  # (Cout, 1)
    inv_std = jax.lax.rsqrt(var + eps)                                      # (Cout, 1)

    # ---- phase 3: fused affine (BN + TEBN per-timestep p) and per-frame writeback.
    # t outer / n inner so the per-timestep affine is computed T times, not N*T times.
    for t in range(T):
        a_t = pg_ref[t] * inv_std                           # (Cout, 1) = p_t*gamma*inv_std
        b_t = pb_ref[t]                                     # (Cout, 1) = p_t*beta
        for n in range(N):
            b = n * T + t
            z = d[b] * a_t + b_t                            # (Cout, HoWo) — 256-lane stores
            o_ref[n, t] = z.astype(o_ref.dtype)


def tebn_layer_forward(x, w_oihw, bias, gamma, beta, p, eps=1e-5, padding=1):
    """x: [N, T, Cin, H, W] (PyTorch layout).  Returns [N, T, Cout, Ho, Wo]."""
    N, T, Cin, H, W = x.shape
    Cout, _, KH, KW = w_oihw.shape
    B = N * T
    Hp, Wp = H + 2 * padding, W + 2 * padding
    Ho, Wo = Hp - KH + 1, Wp - KW + 1

    # Tiny wrapper glue (one fused XLA pass over a ~20 KB tensor):
    # NCHW -> NHWC, zero pad, cast to bf16 (matmul operand dtype).
    # TODO(synk): for large inputs, absorb this pass into the kernel via a zero-initialized
    #             padded VMEM scratch to remove one HBM round trip of the input.
    x_nhwc = jnp.transpose(x.reshape(B, Cin, H, W), (0, 2, 3, 1))
    x_pad = jnp.pad(x_nhwc, ((0, 0), (padding, padding), (padding, padding), (0, 0)))
    x_pad = x_pad.astype(jnp.bfloat16)

    # Parameter prep (a few hundred bytes of glue).
    w_taps = jnp.transpose(w_oihw, (2, 3, 0, 1)).reshape(KH * KW, Cout, Cin)
    w_taps = w_taps.astype(jnp.bfloat16)
    b2 = bias.reshape(Cout, 1).astype(jnp.float32)
    p_t = p.reshape(T, 1).astype(jnp.float32)
    pg = (p_t * gamma.reshape(1, Cout)).reshape(T, Cout, 1)
    pb = (p_t * beta.reshape(1, Cout)).reshape(T, Cout, 1)

    out_flat = pl.pallas_call(
        functools.partial(
            _tebn_fused_kernel,
            N=N, T=T, Cin=Cin, Cout=Cout, H=H, W=W, KH=KH, KW=KW,
            pad=padding, eps=eps),
        out_shape=jax.ShapeDtypeStruct((N, T, Cout, Ho * Wo), jnp.float32),
        scratch_shapes=[pltpu.VMEM((B, Cout, Ho * Wo), jnp.float32)],
    )(x_pad, w_taps, b2, pg, pb)

    # Free row-major reshape (splits the minor dim only); no transpose pass.
    return out_flat.reshape(N, T, Cout, Ho, Wo)


# ---------------------------------------------------------------------------
# Pure-JAX reference (mirrors the PyTorch forward in BN training mode).
# The conv uses the same numerical contract as the kernel (bf16 multiplies,
# f32 accumulation — the MXU's native path), so the comparison isolates the
# kernel's correctness rather than bf16-vs-f32 matmul rounding.
# ---------------------------------------------------------------------------
def reference_forward(x, w_oihw, bias, gamma, beta, p, eps=1e-5, padding=1):
    N, T, Cin, H, W = x.shape
    Cout = w_oihw.shape[0]
    xf = x.reshape(N * T, Cin, H, W).astype(jnp.bfloat16)
    y = jax.lax.conv_general_dilated(
        xf, w_oihw.astype(jnp.bfloat16), window_strides=(1, 1),
        padding=((padding, padding), (padding, padding)),
        dimension_numbers=("NCHW", "OIHW", "NCHW"),
        preferred_element_type=jnp.float32)
    y = y + bias[None, :, None, None]
    Ho, Wo = y.shape[2], y.shape[3]
    y = y.reshape(N, T, Cout, Ho, Wo)
    mean = jnp.mean(y, axis=(0, 1, 3, 4), keepdims=True)
    var = jnp.mean((y - mean) ** 2, axis=(0, 1, 3, 4), keepdims=True)
    yn = (y - mean) * jax.lax.rsqrt(var + eps)
    yn = yn * gamma[None, None, :, None, None] + beta[None, None, :, None, None]
    yn = yn * p.reshape(T)[None, :, None, None, None]
    return yn


if __name__ == "__main__":
    # TEBNLayer(in_plane=4, out_plane=8, kernel_size=3, stride=1, padding=1), T = 4 steps.
    N, T, Cin, Cout, H, W = 2, 4, 4, 8, 16, 16
    KH = KW = 3

    key = jax.random.PRNGKey(0)
    k1, k2, k3, k4, k5, k6 = jax.random.split(key, 6)
    x = jax.random.normal(k1, (N, T, Cin, H, W), jnp.float32)
    w = jax.random.normal(k2, (Cout, Cin, KH, KW), jnp.float32) * 0.1    # Conv2d.weight
    b = jax.random.normal(k3, (Cout,), jnp.float32) * 0.1                # Conv2d.bias
    gamma = 1.0 + 0.1 * jax.random.normal(k4, (Cout,), jnp.float32)      # BN weight
    beta = 0.1 * jax.random.normal(k5, (Cout,), jnp.float32)             # BN bias
    p = 1.0 + 0.1 * jax.random.normal(k6, (T, 1, 1, 1, 1), jnp.float32)  # TEBN.p

    out = tebn_layer_forward(x, w, b, gamma, beta, p)
    out = jax.block_until_ready(out)

    ref = reference_forward(x, w, b, gamma, beta, p)
    assert out.shape == (N, T, Cout, H, W), out.shape
    max_err = float(jnp.max(jnp.abs(out - ref)))
    # Matched precision (bf16 multiplies, f32 accumulation) on both sides: the expected
    # difference is accumulation-order / transcendental-implementation noise only.
    if max_err < 2e-3:
        print("KERNEL_OK")
    else:
        print(f"MISMATCH max_abs_err={max_err}")
</pallas_src>

<mosaic_0001>
module attributes {stable_mosaic.version = 11 : i64} {
  func.func @_tebn_fused_kernel(%arg0: memref<8x18x18x4xbf16, #tpu.memory_space<vmem>>, %arg1: memref<9x8x4xbf16, #tpu.memory_space<vmem>>, %arg2: memref<8x1xf32, #tpu.memory_space<vmem>>, %arg3: memref<4x8x1xf32, #tpu.memory_space<vmem>>, %arg4: memref<4x8x1xf32, #tpu.memory_space<vmem>>, %arg5: memref<2x4x8x256xf32, #tpu.memory_space<vmem>>, %arg6: memref<8x8x256xf32, #tpu.memory_space<vmem>>) attributes {dimension_semantics = [], scalar_prefetch = 0 : i64, scratch_operands = 1 : i64, tpu.core_type = #tpu.core_type<tc>} {
    %c0 = arith.constant 0 : index
    %c0_0 = arith.constant 0 : index
    %0 = vector.load %arg2[%c0, %c0_0] : memref<8x1xf32, #tpu.memory_space<vmem>>, vector<8x1xf32>
    %c0_i32 = arith.constant 0 : i32
    %c8_i32 = arith.constant 8 : i32
    %1 = arith.addi %c0_i32, %c8_i32 : i32
    %c1_i32 = arith.constant 1 : i32
    scf.for %arg7 = %c0_i32 to %1 step %c1_i32  : i32 {
      %cst_64 = arith.constant 0.000000e+00 : f32
      %112 = vector.broadcast %cst_64 : f32 to vector<8x256xf32>
      %113 = arith.index_cast %arg7 : i32 to index
      %c0_65 = arith.constant 0 : index
      %c0_66 = arith.constant 0 : index
      %c0_67 = arith.constant 0 : index
      %114 = vector.load %arg0[%113, %c0_65, %c0_66, %c0_67] : memref<8x18x18x4xbf16, #tpu.memory_space<vmem>>, vector<1x16x16x4xbf16>
      %115 = vector.shape_cast %114 : vector<1x16x16x4xbf16> to vector<16x16x4xbf16>
      %116 = vector.shape_cast %115 : vector<16x16x4xbf16> to vector<256x4xbf16>
      %c0_68 = arith.constant 0 : index
      %c0_69 = arith.constant 0 : index
      %c0_70 = arith.constant 0 : index
      %117 = vector.load %arg1[%c0_68, %c0_69, %c0_70] : memref<9x8x4xbf16, #tpu.memory_space<vmem>>, vector<1x8x4xbf16>
      %118 = vector.shape_cast %117 : vector<1x8x4xbf16> to vector<8x4xbf16>
      %cst_71 = arith.constant dense<0.000000e+00> : vector<8x256xf32>
      %119 = tpu.matmul %118, %116, %cst_71 {dimension_numbers = #tpu.dot_dimension_numbers<[1], [1], [0], [0], [0, 0, 1, 0], [], []>} : vector<8x4xbf16>, vector<256x4xbf16>, vector<8x256xf32> -> vector<8x256xf32>
      %120 = arith.addf %112, %119 : vector<8x256xf32>
      %121 = arith.index_cast %arg7 : i32 to index
      %c0_72 = arith.constant 0 : index
      %c1_73 = arith.constant 1 : index
      %c0_74 = arith.constant 0 : index
      %122 = vector.load %arg0[%121, %c0_72, %c1_73, %c0_74] : memref<8x18x18x4xbf16, #tpu.memory_space<vmem>>, vector<1x16x16x4xbf16>
      %123 = vector.shape_cast %122 : vector<1x16x16x4xbf16> to vector<16x16x4xbf16>
      %124 = vector.shape_cast %123 : vector<16x16x4xbf16> to vector<256x4xbf16>
      %c1_75 = arith.constant 1 : index
      %c0_76 = arith.constant 0 : index
      %c0_77 = arith.constant 0 : index
      %125 = vector.load %arg1[%c1_75, %c0_76, %c0_77] : memref<9x8x4xbf16, #tpu.memory_space<vmem>>, vector<1x8x4xbf16>
      %126 = vector.shape_cast %125 : vector<1x8x4xbf16> to vector<8x4xbf16>
      %cst_78 = arith.constant dense<0.000000e+00> : vector<8x256xf32>
      %127 = tpu.matmul %126, %124, %cst_78 {dimension_numbers = #tpu.dot_dimension_numbers<[1], [1], [0], [0], [0, 0, 1, 0], [], []>} : vector<8x4xbf16>, vector<256x4xbf16>, vector<8x256xf32> -> vector<8x256xf32>
      %128 = arith.addf %120, %127 : vector<8x256xf32>
      %129 = arith.index_cast %arg7 : i32 to index
      %c0_79 = arith.constant 0 : index
      %c2_80 = arith.constant 2 : index
      %c0_81 = arith.constant 0 : index
      %130 = vector.load %arg0[%129, %c0_79, %c2_80, %c0_81] : memref<8x18x18x4xbf16, #tpu.memory_space<vmem>>, vector<1x16x16x4xbf16>
      %131 = vector.shape_cast %130 : vector<1x16x16x4xbf16> to vector<16x16x4xbf16>
      %132 = vector.shape_cast %131 : vector<16x16x4xbf16> to vector<256x4xbf16>
      %c2_82 = arith.constant 2 : index
      %c0_83 = arith.constant 0 : index
      %c0_84 = arith.constant 0 : index
      %133 = vector.load %arg1[%c2_82, %c0_83, %c0_84] : memref<9x8x4xbf16, #tpu.memory_space<vmem>>, vector<1x8x4xbf16>
      %134 = vector.shape_cast %133 : vector<1x8x4xbf16> to vector<8x4xbf16>
      %cst_85 = arith.constant dense<0.000000e+00> : vector<8x256xf32>
      %135 = tpu.matmul %134, %132, %cst_85 {dimension_numbers = #tpu.dot_dimension_numbers<[1], [1], [0], [0], [0, 0, 1, 0], [], []>} : vector<8x4xbf16>, vector<256x4xbf16>, vector<8x256xf32> -> vector<8x256xf32>
      %136 = arith.addf %128, %135 : vector<8x256xf32>
      %137 = arith.index_cast %arg7 : i32 to index
      %c1_86 = arith.constant 1 : index
      %c0_87 = arith.constant 0 : index
      %c0_88 = arith.constant 0 : index
      %138 = vector.load %arg0[%137, %c1_86, %c0_87, %c0_88] : memref<8x18x18x4xbf16, #tpu.memory_space<vmem>>, vector<1x16x16x4xbf16>
      %139 = vector.shape_cast %138 : vector<1x16x16x4xbf16> to vector<16x16x4xbf16>
      %140 = vector.shape_cast %139 : vector<16x16x4xbf16> to vector<256x4xbf16>
      %c3_89 = arith.constant 3 : index
      %c0_90 = arith.constant 0 : index
      %c0_91 = arith.constant 0 : index
      %141 = vector.load %arg1[%c3_89, %c0_90, %c0_91] : memref<9x8x4xbf16, #tpu.memory_space<vmem>>, vector<1x8x4xbf16>
      %142 = vector.shape_cast %141 : vector<1x8x4xbf16> to vector<8x4xbf16>
      %cst_92 = arith.constant dense<0.000000e+00> : vector<8x256xf32>
      %143 = tpu.matmul %142, %140, %cst_92 {dimension_numbers = #tpu.dot_dimension_numbers<[1], [1], [0], [0], [0, 0, 1, 0], [], []>} : vector<8x4xbf16>, vector<256x4xbf16>, vector<8x256xf32> -> vector<8x256xf32>
      %144 = arith.addf %136, %143 : vector<8x256xf32>
      %145 = arith.index_cast %arg7 : i32 to index
      %c1_93 = arith.constant 1 : index
      %c1_94 = arith.constant 1 : index
      %c0_95 = arith.constant 0 : index
      %146 = vector.load %arg0[%145, %c1_93, %c1_94, %c0_95] : memref<8x18x18x4xbf16, #tpu.memory_space<vmem>>, vector<1x16x16x4xbf16>
      %147 = vector.shape_cast %146 : vector<1x16x16x4xbf16> to vector<16x16x4xbf16>
      %148 = vector.shape_cast %147 : vector<16x16x4xbf16> to vector<256x4xbf16>
      %c4 = arith.constant 4 : index
      %c0_96 = arith.constant 0 : index
      %c0_97 = arith.constant 0 : index
      %149 = vector.load %arg1[%c4, %c0_96, %c0_97] : memref<9x8x4xbf16, #tpu.memory_space<vmem>>, vector<1x8x4xbf16>
      %150 = vector.shape_cast %149 : vector<1x8x4xbf16> to vector<8x4xbf16>
      %cst_98 = arith.constant dense<0.000000e+00> : vector<8x256xf32>
      %151 = tpu.matmul %150, %148, %cst_98 {dimension_numbers = #tpu.dot_dimension_numbers<[1], [1], [0], [0], [0, 0, 1, 0], [], []>} : vector<8x4xbf16>, vector<256x4xbf16>, vector<8x256xf32> -> vector<8x256xf32>
      %152 = arith.addf %144, %151 : vector<8x256xf32>
      %153 = arith.index_cast %arg7 : i32 to index
      %c1_99 = arith.constant 1 : index
      %c2_100 = arith.constant 2 : index
      %c0_101 = arith.constant 0 : index
      %154 = vector.load %arg0[%153, %c1_99, %c2_100, %c0_101] : memref<8x18x18x4xbf16, #tpu.memory_space<vmem>>, vector<1x16x16x4xbf16>
      %155 = vector.shape_cast %154 : vector<1x16x16x4xbf16> to vector<16x16x4xbf16>
      %156 = vector.shape_cast %155 : vector<16x16x4xbf16> to vector<256x4xbf16>
      %c5 = arith.constant 5 : index
      %c0_102 = arith.constant 0 : index
      %c0_103 = arith.constant 0 : index
      %157 = vector.load %arg1[%c5, %c0_102, %c0_103] : memref<9x8x4xbf16, #tpu.memory_space<vmem>>, vector<1x8x4xbf16>
      %158 = vector.shape_cast %157 : vector<1x8x4xbf16> to vector<8x4xbf16>
      %cst_104 = arith.constant dense<0.000000e+00> : vector<8x256xf32>
      %159 = tpu.matmul %158, %156, %cst_104 {dimension_numbers = #tpu.dot_dimension_numbers<[1], [1], [0], [0], [0, 0, 1, 0], [], []>} : vector<8x4xbf16>, vector<256x4xbf16>, vector<8x256xf32> -> vector<8x256xf32>
      %160 = arith.addf %152, %159 : vector<8x256xf32>
      %161 = arith.index_cast %arg7 : i32 to index
      %c2_105 = arith.constant 2 : index
      %c0_106 = arith.constant 0 : index
      %c0_107 = arith.constant 0 : index
      %162 = vector.load %arg0[%161, %c2_105, %c0_106, %c0_107] : memref<8x18x18x4xbf16, #tpu.memory_space<vmem>>, vector<1x16x16x4xbf16>
      %163 = vector.shape_cast %162 : vector<1x16x16x4xbf16> to vector<16x16x4xbf16>
      %164 = vector.shape_cast %163 : vector<16x16x4xbf16> to vector<256x4xbf16>
      %c6 = arith.constant 6 : index
      %c0_108 = arith.constant 0 : index
      %c0_109 = arith.constant 0 : index
      %165 = vector.load %arg1[%c6, %c0_108, %c0_109] : memref<9x8x4xbf16, #tpu.memory_space<vmem>>, vector<1x8x4xbf16>
      %166 = vector.shape_cast %165 : vector<1x8x4xbf16> to vector<8x4xbf16>
      %cst_110 = arith.constant dense<0.000000e+00> : vector<8x256xf32>
      %167 = tpu.matmul %166, %164, %cst_110 {dimension_numbers = #tpu.dot_dimension_numbers<[1], [1], [0], [0], [0, 0, 1, 0], [], []>} : vector<8x4xbf16>, vector<256x4xbf16>, vector<8x256xf32> -> vector<8x256xf32>
      %168 = arith.addf %160, %167 : vector<8x256xf32>
      %169 = arith.index_cast %arg7 : i32 to index
      %c2_111 = arith.constant 2 : index
      %c1_112 = arith.constant 1 : index
      %c0_113 = arith.constant 0 : index
      %170 = vector.load %arg0[%169, %c2_111, %c1_112, %c0_113] : memref<8x18x18x4xbf16, #tpu.memory_space<vmem>>, vector<1x16x16x4xbf16>
      %171 = vector.shape_cast %170 : vector<1x16x16x4xbf16> to vector<16x16x4xbf16>
      %172 = vector.shape_cast %171 : vector<16x16x4xbf16> to vector<256x4xbf16>
      %c7 = arith.constant 7 : index
      %c0_114 = arith.constant 0 : index
      %c0_115 = arith.constant 0 : index
      %173 = vector.load %arg1[%c7, %c0_114, %c0_115] : memref<9x8x4xbf16, #tpu.memory_space<vmem>>, vector<1x8x4xbf16>
      %174 = vector.shape_cast %173 : vector<1x8x4xbf16> to vector<8x4xbf16>
      %cst_116 = arith.constant dense<0.000000e+00> : vector<8x256xf32>
      %175 = tpu.matmul %174, %172, %cst_116 {dimension_numbers = #tpu.dot_dimension_numbers<[1], [1], [0], [0], [0, 0, 1, 0], [], []>} : vector<8x4xbf16>, vector<256x4xbf16>, vector<8x256xf32> -> vector<8x256xf32>
      %176 = arith.addf %168, %175 : vector<8x256xf32>
      %177 = arith.index_cast %arg7 : i32 to index
      %c2_117 = arith.constant 2 : index
      %c2_118 = arith.constant 2 : index
      %c0_119 = arith.constant 0 : index
      %178 = vector.load %arg0[%177, %c2_117, %c2_118, %c0_119] : memref<8x18x18x4xbf16, #tpu.memory_space<vmem>>, vector<1x16x16x4xbf16>
      %179 = vector.shape_cast %178 : vector<1x16x16x4xbf16> to vector<16x16x4xbf16>
      %180 = vector.shape_cast %179 : vector<16x16x4xbf16> to vector<256x4xbf16>
      %c8 = arith.constant 8 : index
      %c0_120 = arith.constant 0 : index
      %c0_121 = arith.constant 0 : index
      %181 = vector.load %arg1[%c8, %c0_120, %c0_121] : memref<9x8x4xbf16, #tpu.memory_space<vmem>>, vector<1x8x4xbf16>
      %182 = vector.shape_cast %181 : vector<1x8x4xbf16> to vector<8x4xbf16>
      %cst_122 = arith.constant dense<0.000000e+00> : vector<8x256xf32>
      %183 = tpu.matmul %182, %180, %cst_122 {dimension_numbers = #tpu.dot_dimension_numbers<[1], [1], [0], [0], [0, 0, 1, 0], [], []>} : vector<8x4xbf16>, vector<256x4xbf16>, vector<8x256xf32> -> vector<8x256xf32>
      %184 = arith.addf %176, %183 : vector<8x256xf32>
      %185 = vector.broadcast %0 : vector<8x1xf32> to vector<8x256xf32>
      %186 = arith.addf %184, %185 : vector<8x256xf32>
      %187 = arith.index_cast %arg7 : i32 to index
      %c0_123 = arith.constant 0 : index
      %c0_124 = arith.constant 0 : index
      %188 = vector.load %arg6[%187, %c0_123, %c0_124] : memref<8x8x256xf32, #tpu.memory_space<vmem>>, vector<1x8x256xf32>
      %189 = vector.shape_cast %188 : vector<1x8x256xf32> to vector<8x256xf32>
      %190 = vector.shape_cast %186 : vector<8x256xf32> to vector<1x8x256xf32>
      tpu.vector_store %arg6[%187, %c0_123, %c0_124], %190 {strides = array<i32>} : memref<8x8x256xf32, #tpu.memory_space<vmem>>, vector<1x8x256xf32>,
    }
    %c8_i32_1 = arith.constant 8 : i32
    %c0_2 = arith.constant 0 : index
    %c0_3 = arith.constant 0 : index
    %c0_4 = arith.constant 0 : index
    %2 = vector.load %arg6[%c0_2, %c0_3, %c0_4] : memref<8x8x256xf32, #tpu.memory_space<vmem>>, vector<8x8x256xf32>
    %cst = arith.constant dense<0.000000e+00> : vector<8x8xf32>
    %3 = vector.multi_reduction <add>, %2, %cst [2] : vector<8x8x256xf32> to vector<8x8xf32>
    %4 = vector.shape_cast %3 : vector<8x8xf32> to vector<8x8x1xf32>
    %cst_5 = arith.constant dense<0.000000e+00> : vector<8x1xf32>
    %5 = vector.multi_reduction <add>, %4, %cst_5 [0] : vector<8x8x1xf32> to vector<8x1xf32>
    %cst_6 = arith.constant 4.8828125E-4 : f32
    %6 = vector.broadcast %cst_6 : f32 to vector<8x1xf32>
    %7 = arith.mulf %5, %6 : vector<8x1xf32>
    %8 = vector.shape_cast %7 : vector<8x1xf32> to vector<1x8x1xf32>
    %9 = vector.broadcast %8 : vector<1x8x1xf32> to vector<8x8x256xf32>
    %10 = arith.subf %2, %9 : vector<8x8x256xf32>
    %11 = arith.mulf %10, %10 : vector<8x8x256xf32>
    %cst_7 = arith.constant dense<0.000000e+00> : vector<8x8xf32>
    %12 = vector.multi_reduction <add>, %11, %cst_7 [2] : vector<8x8x256xf32> to vector<8x8xf32>
    %13 = vector.shape_cast %12 : vector<8x8xf32> to vector<8x8x1xf32>
    %cst_8 = arith.constant dense<0.000000e+00> : vector<8x1xf32>
    %14 = vector.multi_reduction <add>, %13, %cst_8 [0] : vector<8x8x1xf32> to vector<8x1xf32>
    %cst_9 = arith.constant 4.8828125E-4 : f32
    %15 = vector.broadcast %cst_9 : f32 to vector<8x1xf32>
    %16 = arith.mulf %14, %15 : vector<8x1xf32>
    %cst_10 = arith.constant 9.99999974E-6 : f32
    %17 = vector.broadcast %cst_10 : f32 to vector<8x1xf32>
    %18 = arith.addf %16, %17 : vector<8x1xf32>
    %19 = math.rsqrt %18 : vector<8x1xf32>
    %c0_11 = arith.constant 0 : index
    %c0_12 = arith.constant 0 : index
    %c0_13 = arith.constant 0 : index
    %20 = vector.load %arg3[%c0_11, %c0_12, %c0_13] : memref<4x8x1xf32, #tpu.memory_space<vmem>>, vector<1x8x1xf32>
    %21 = vector.shape_cast %20 : vector<1x8x1xf32> to vector<8x1xf32>
    %22 = arith.mulf %21, %19 : vector<8x1xf32>
    %c0_14 = arith.constant 0 : index
    %c0_15 = arith.constant 0 : index
    %c0_16 = arith.constant 0 : index
    %23 = vector.load %arg4[%c0_14, %c0_15, %c0_16] : memref<4x8x1xf32, #tpu.memory_space<vmem>>, vector<1x8x1xf32>
    %24 = vector.shape_cast %23 : vector<1x8x1xf32> to vector<8x1xf32>
    %25 = vector.extract_strided_slice %10 {offsets = [0, 0, 0], sizes = [1, 8, 256], strides = [1, 1, 1]} : vector<8x8x256xf32> to vector<1x8x256xf32>
    %26 = vector.shape_cast %25 : vector<1x8x256xf32> to vector<8x256xf32>
    %27 = vector.broadcast %22 : vector<8x1xf32> to vector<8x256xf32>
    %28 = arith.mulf %26, %27 : vector<8x256xf32>
    %29 = vector.broadcast %24 : vector<8x1xf32> to vector<8x256xf32>
    %30 = arith.addf %28, %29 : vector<8x256xf32>
    %c0_17 = arith.constant 0 : index
    %c0_18 = arith.constant 0 : index
    %c0_19 = arith.constant 0 : index
    %c0_20 = arith.constant 0 : index
    %31 = vector.load %arg5[%c0_17, %c0_18, %c0_19, %c0_20] : memref<2x4x8x256xf32, #tpu.memory_space<vmem>>, vector<1x1x8x256xf32>
    %32 = vector.shape_cast %31 : vector<1x1x8x256xf32> to vector<8x256xf32>
    %33 = vector.shape_cast %30 : vector<8x256xf32> to vector<1x1x8x256xf32>
    tpu.vector_store %arg5[%c0_17, %c0_18, %c0_19, %c0_20], %33 {strides = array<i32>} : memref<2x4x8x256xf32, #tpu.memory_space<vmem>>, vector<1x1x8x256xf32>,
    %34 = vector.extract_strided_slice %10 {offsets = [4, 0, 0], sizes = [1, 8, 256], strides = [1, 1, 1]} : vector<8x8x256xf32> to vector<1x8x256xf32>
    %35 = vector.shape_cast %34 : vector<1x8x256xf32> to vector<8x256xf32>
    %36 = vector.broadcast %22 : vector<8x1xf32> to vector<8x256xf32>
    %37 = arith.mulf %35, %36 : vector<8x256xf32>
    %38 = vector.broadcast %24 : vector<8x1xf32> to vector<8x256xf32>
    %39 = arith.addf %37, %38 : vector<8x256xf32>
    %c1 = arith.constant 1 : index
    %c0_21 = arith.constant 0 : index
    %c0_22 = arith.constant 0 : index
    %c0_23 = arith.constant 0 : index
    %40 = vector.load %arg5[%c1, %c0_21, %c0_22, %c0_23] : memref<2x4x8x256xf32, #tpu.memory_space<vmem>>, vector<1x1x8x256xf32>
    %41 = vector.shape_cast %40 : vector<1x1x8x256xf32> to vector<8x256xf32>
    %42 = vector.shape_cast %39 : vector<8x256xf32> to vector<1x1x8x256xf32>
    tpu.vector_store %arg5[%c1, %c0_21, %c0_22, %c0_23], %42 {strides = array<i32>} : memref<2x4x8x256xf32, #tpu.memory_space<vmem>>, vector<1x1x8x256xf32>,
    %c1_24 = arith.constant 1 : index
    %c0_25 = arith.constant 0 : index
    %c0_26 = arith.constant 0 : index
    %43 = vector.load %arg3[%c1_24, %c0_25, %c0_26] : memref<4x8x1xf32, #tpu.memory_space<vmem>>, vector<1x8x1xf32>
    %44 = vector.shape_cast %43 : vector<1x8x1xf32> to vector<8x1xf32>
    %45 = arith.mulf %44, %19 : vector<8x1xf32>
    %c1_27 = arith.constant 1 : index
    %c0_28 = arith.constant 0 : index
    %c0_29 = arith.constant 0 : index
    %46 = vector.load %arg4[%c1_27, %c0_28, %c0_29] : memref<4x8x1xf32, #tpu.memory_space<vmem>>, vector<1x8x1xf32>
    %47 = vector.shape_cast %46 : vector<1x8x1xf32> to vector<8x1xf32>
    %48 = vector.extract_strided_slice %10 {offsets = [1, 0, 0], sizes = [1, 8, 256], strides = [1, 1, 1]} : vector<8x8x256xf32> to vector<1x8x256xf32>
    %49 = vector.shape_cast %48 : vector<1x8x256xf32> to vector<8x256xf32>
    %50 = vector.broadcast %45 : vector<8x1xf32> to vector<8x256xf32>
    %51 = arith.mulf %49, %50 : vector<8x256xf32>
    %52 = vector.broadcast %47 : vector<8x1xf32> to vector<8x256xf32>
    %53 = arith.addf %51, %52 : vector<8x256xf32>
    %c0_30 = arith.constant 0 : index
    %c1_31 = arith.constant 1 : index
    %c0_32 = arith.constant 0 : index
    %c0_33 = arith.constant 0 : index
    %54 = vector.load %arg5[%c0_30, %c1_31, %c0_32, %c0_33] : memref<2x4x8x256xf32, #tpu.memory_space<vmem>>, vector<1x1x8x256xf32>
    %55 = vector.shape_cast %54 : vector<1x1x8x256xf32> to vector<8x256xf32>
    %56 = vector.shape_cast %53 : vector<8x256xf32> to vector<1x1x8x256xf32>
    tpu.vector_store %arg5[%c0_30, %c1_31, %c0_32, %c0_33], %56 {strides = array<i32>} : memref<2x4x8x256xf32, #tpu.memory_space<vmem>>, vector<1x1x8x256xf32>,
    %57 = vector.extract_strided_slice %10 {offsets = [5, 0, 0], sizes = [1, 8, 256], strides = [1, 1, 1]} : vector<8x8x256xf32> to vector<1x8x256xf32>
    %58 = vector.shape_cast %57 : vector<1x8x256xf32> to vector<8x256xf32>
    %59 = vector.broadcast %45 : vector<8x1xf32> to vector<8x256xf32>
    %60 = arith.mulf %58, %59 : vector<8x256xf32>
    %61 = vector.broadcast %47 : vector<8x1xf32> to vector<8x256xf32>
    %62 = arith.addf %60, %61 : vector<8x256xf32>
    %c1_34 = arith.constant 1 : index
    %c1_35 = arith.constant 1 : index
    %c0_36 = arith.constant 0 : index
    %c0_37 = arith.constant 0 : index
    %63 = vector.load %arg5[%c1_34, %c1_35, %c0_36, %c0_37] : memref<2x4x8x256xf32, #tpu.memory_space<vmem>>, vector<1x1x8x256xf32>
    %64 = vector.shape_cast %63 : vector<1x1x8x256xf32> to vector<8x256xf32>
    %65 = vector.shape_cast %62 : vector<8x256xf32> to vector<1x1x8x256xf32>
    tpu.vector_store %arg5[%c1_34, %c1_35, %c0_36, %c0_37], %65 {strides = array<i32>} : memref<2x4x8x256xf32, #tpu.memory_space<vmem>>, vector<1x1x8x256xf32>,
    %c2 = arith.constant 2 : index
    %c0_38 = arith.constant 0 : index
    %c0_39 = arith.constant 0 : index
    %66 = vector.load %arg3[%c2, %c0_38, %c0_39] : memref<4x8x1xf32, #tpu.memory_space<vmem>>, vector<1x8x1xf32>
    %67 = vector.shape_cast %66 : vector<1x8x1xf32> to vector<8x1xf32>
    %68 = arith.mulf %67, %19 : vector<8x1xf32>
    %c2_40 = arith.constant 2 : index
    %c0_41 = arith.constant 0 : index
    %c0_42 = arith.constant 0 : index
    %69 = vector.load %arg4[%c2_40, %c0_41, %c0_42] : memref<4x8x1xf32, #tpu.memory_space<vmem>>, vector<1x8x1xf32>
    %70 = vector.shape_cast %69 : vector<1x8x1xf32> to vector<8x1xf32>
    %71 = vector.extract_strided_slice %10 {offsets = [2, 0, 0], sizes = [1, 8, 256], strides = [1, 1, 1]} : vector<8x8x256xf32> to vector<1x8x256xf32>
    %72 = vector.shape_cast %71 : vector<1x8x256xf32> to vector<8x256xf32>
    %73 = vector.broadcast %68 : vector<8x1xf32> to vector<8x256xf32>
    %74 = arith.mulf %72, %73 : vector<8x256xf32>
    %75 = vector.broadcast %70 : vector<8x1xf32> to vector<8x256xf32>
    %76 = arith.addf %74, %75 : vector<8x256xf32>
    %c0_43 = arith.constant 0 : index
    %c2_44 = arith.constant 2 : index
    %c0_45 = arith.constant 0 : index
    %c0_46 = arith.constant 0 : index
    %77 = vector.load %arg5[%c0_43, %c2_44, %c0_45, %c0_46] : memref<2x4x8x256xf32, #tpu.memory_space<vmem>>, vector<1x1x8x256xf32>
    %78 = vector.shape_cast %77 : vector<1x1x8x256xf32> to vector<8x256xf32>
    %79 = vector.shape_cast %76 : vector<8x256xf32> to vector<1x1x8x256xf32>
    tpu.vector_store %arg5[%c0_43, %c2_44, %c0_45, %c0_46], %79 {strides = array<i32>} : memref<2x4x8x256xf32, #tpu.memory_space<vmem>>, vector<1x1x8x256xf32>,
    %80 = vector.extract_strided_slice %10 {offsets = [6, 0, 0], sizes = [1, 8, 256], strides = [1, 1, 1]} : vector<8x8x256xf32> to vector<1x8x256xf32>
    %81 = vector.shape_cast %80 : vector<1x8x256xf32> to vector<8x256xf32>
    %82 = vector.broadcast %68 : vector<8x1xf32> to vector<8x256xf32>
    %83 = arith.mulf %81, %82 : vector<8x256xf32>
    %84 = vector.broadcast %70 : vector<8x1xf32> to vector<8x256xf32>
    %85 = arith.addf %83, %84 : vector<8x256xf32>
    %c1_47 = arith.constant 1 : index
    %c2_48 = arith.constant 2 : index
    %c0_49 = arith.constant 0 : index
    %c0_50 = arith.constant 0 : index
    %86 = vector.load %arg5[%c1_47, %c2_48, %c0_49, %c0_50] : memref<2x4x8x256xf32, #tpu.memory_space<vmem>>, vector<1x1x8x256xf32>
    %87 = vector.shape_cast %86 : vector<1x1x8x256xf32> to vector<8x256xf32>
    %88 = vector.shape_cast %85 : vector<8x256xf32> to vector<1x1x8x256xf32>
    tpu.vector_store %arg5[%c1_47, %c2_48, %c0_49, %c0_50], %88 {strides = array<i32>} : memref<2x4x8x256xf32, #tpu.memory_space<vmem>>, vector<1x1x8x256xf32>,
    %c3 = arith.constant 3 : index
    %c0_51 = arith.constant 0 : index
    %c0_52 = arith.constant 0 : index
    %89 = vector.load %arg3[%c3, %c0_51, %c0_52] : memref<4x8x1xf32, #tpu.memory_space<vmem>>, vector<1x8x1xf32>
    %90 = vector.shape_cast %89 : vector<1x8x1xf32> to vector<8x1xf32>
    %91 = arith.mulf %90, %19 : vector<8x1xf32>
    %c3_53 = arith.constant 3 : index
    %c0_54 = arith.constant 0 : index
    %c0_55 = arith.constant 0 : index
    %92 = vector.load %arg4[%c3_53, %c0_54, %c0_55] : memref<4x8x1xf32, #tpu.memory_space<vmem>>, vector<1x8x1xf32>
    %93 = vector.shape_cast %92 : vector<1x8x1xf32> to vector<8x1xf32>
    %94 = vector.extract_strided_slice %10 {offsets = [3, 0, 0], sizes = [1, 8, 256], strides = [1, 1, 1]} : vector<8x8x256xf32> to vector<1x8x256xf32>
    %95 = vector.shape_cast %94 : vector<1x8x256xf32> to vector<8x256xf32>
    %96 = vector.broadcast %91 : vector<8x1xf32> to vector<8x256xf32>
    %97 = arith.mulf %95, %96 : vector<8x256xf32>
    %98 = vector.broadcast %93 : vector<8x1xf32> to vector<8x256xf32>
    %99 = arith.addf %97, %98 : vector<8x256xf32>
    %c0_56 = arith.constant 0 : index
    %c3_57 = arith.constant 3 : index
    %c0_58 = arith.constant 0 : index
    %c0_59 = arith.constant 0 : index
    %100 = vector.load %arg5[%c0_56, %c3_57, %c0_58, %c0_59] : memref<2x4x8x256xf32, #tpu.memory_space<vmem>>, vector<1x1x8x256xf32>
    %101 = vector.shape_cast %100 : vector<1x1x8x256xf32> to vector<8x256xf32>
    %102 = vector.shape_cast %99 : vector<8x256xf32> to vector<1x1x8x256xf32>
    tpu.vector_store %arg5[%c0_56, %c3_57, %c0_58, %c0_59], %102 {strides = array<i32>} : memref<2x4x8x256xf32, #tpu.memory_space<vmem>>, vector<1x1x8x256xf32>,
    %103 = vector.extract_strided_slice %10 {offsets = [7, 0, 0], sizes = [1, 8, 256], strides = [1, 1, 1]} : vector<8x8x256xf32> to vector<1x8x256xf32>
    %104 = vector.shape_cast %103 : vector<1x8x256xf32> to vector<8x256xf32>
    %105 = vector.broadcast %91 : vector<8x1xf32> to vector<8x256xf32>
    %106 = arith.mulf %104, %105 : vector<8x256xf32>
    %107 = vector.broadcast %93 : vector<8x1xf32> to vector<8x256xf32>
    %108 = arith.addf %106, %107 : vector<8x256xf32>
    %c1_60 = arith.constant 1 : index
    %c3_61 = arith.constant 3 : index
    %c0_62 = arith.constant 0 : index
    %c0_63 = arith.constant 0 : index
    %109 = vector.load %arg5[%c1_60, %c3_61, %c0_62, %c0_63] : memref<2x4x8x256xf32, #tpu.memory_space<vmem>>, vector<1x1x8x256xf32>
    %110 = vector.shape_cast %109 : vector<1x1x8x256xf32> to vector<8x256xf32>
    %111 = vector.shape_cast %108 : vector<8x256xf32> to vector<1x1x8x256xf32>
    tpu.vector_store %arg5[%c1_60, %c3_61, %c0_62, %c0_63], %111 {strides = array<i32>} : memref<2x4x8x256xf32, #tpu.memory_space<vmem>>, vector<1x1x8x256xf32>,
    return
  }
}

</mosaic_0001>

<llo_original>
// kernel: tpu_custom_call.1
$region0: #{tpu_custom_call.1}
  #allocation0 [shape = 'u32[]', space=smem, size = 0x4, offset = 0x4, fixed_abs, tag = 'smem constant byte address 0x4 - core index']
  #allocation1 [shape = 'u32[144,128]{1,0:T(1,128)}', space=vmem, size = 0x12000, scoped, tag = 'internal scratch']
  #allocation2 [shape = 'f32[8,8,256]{2,1,0:T(8,128)}', space=vmem, size = 0x10000, scoped, tag = 'scratch operand']
  %s0 = inlined_call_operand.vmem [shape: bf16[8,18,18,4], index: 0, kind: input, shape index: {}]
  %s1 = inlined_call_operand.vmem [shape: bf16[9,8,4], index: 1, kind: input, shape index: {}]
  %s2 = inlined_call_operand.vmem [shape: f32[8,1], index: 2, kind: input, shape index: {}]
  %s3 = inlined_call_operand.vmem [shape: f32[4,8,1], index: 3, kind: input, shape index: {}]
  %s4 = inlined_call_operand.vmem [shape: f32[4,8,1], index: 4, kind: input, shape index: {}]
  %s5 = inlined_call_operand.hbm [shape: f32[2,4,8,256], index: 5, kind: output, shape index: {}]
  %s6 = sld [smem:[#allocation0]]
  $region37: #{tpu_custom_call.1} parent=0
    _
  %s8 = ssub.s32 1, %s6
  %s9 = scalar_select 0, %s8, %s6
  $region1: #{tpu_custom_call.1} parent=0
    #allocation3 [shape = 'u8[65536]{0}', space=vmem, size = 0x10000, scoped, tag = 'output window, operand 0, single buffered']
    #allocation4 [shape = 's32[1]{0}', space=sflag, size = 0x4, scoped, tag = 'scoped memory for tpu_custom_call.1']
    %10 = vsyncpa [#allocation4], 0
    // Predicated region
    $region2: #{tpu_custom_call.1} parent=1 // pred_check
      _
    $region3: #{tpu_custom_call.1} parent=1 // pred_check_branch
      %12 = sbr.rel (0) target = $region5
    $region4: #{tpu_custom_call.1} parent=1 // pred_region
      _
    $region5: #{tpu_custom_call.1} parent=1 // pred_fallthru
      _
    // Predicated region
    $region6: #{tpu_custom_call.1} parent=1 // pred_check
      _
    $region7: #{tpu_custom_call.1} parent=1 // pred_check_branch
      %14 = sbr.rel (0) target = $region9
    $region8: #{tpu_custom_call.1} parent=1 // pred_region
      _
    $region9: #{tpu_custom_call.1} parent=1 // pred_fallthru
      _
    // Predicated region
    $region10: #{tpu_custom_call.1} parent=1 // pred_check
      _
    $region11: #{tpu_custom_call.1} parent=1 // pred_check_branch
      %16 = sbr.rel (0) target = $region13
    $region12: #{tpu_custom_call.1} parent=1 // pred_region
      _
    $region13: #{tpu_custom_call.1} parent=1 // pred_fallthru
      _
    // Predicated region
    $region14: #{tpu_custom_call.1} parent=1 // pred_check
      _
    $region15: #{tpu_custom_call.1} parent=1 // pred_check_branch
      %18 = sbr.rel (0) target = $region17
    $region16: #{tpu_custom_call.1} parent=1 // pred_region
      _
    $region17: #{tpu_custom_call.1} parent=1 // pred_fallthru
      _
    // Predicated region
    $region18: #{tpu_custom_call.1} parent=1 // pred_check
      _
    $region19: #{tpu_custom_call.1} parent=1 // pred_check_branch
      %20 = sbr.rel (0) target = $region21
    $region20: #{tpu_custom_call.1} parent=1 // pred_region
      _
    $region21: #{tpu_custom_call.1} parent=1 // pred_fallthru
      _
    %v22 = vld [vmem:[%s2] sm:$0xff]
    loop: start=0, step=1, limit=8
    $region22: #{tpu_custom_call.1} parent=1 // loop_pre_header
      _
    $region23: #{tpu_custom_call.1} parent=1 // loop_header
      %s24 = sphi 0, %s28
      %p25 = scmp.ge.s32.totalorder %s24, 8
    $region24: #{tpu_custom_call.1} parent=1 // loop_header_branch
      %27 = sbr.rel (%p25) target = $region28
    $region25: #{tpu_custom_call.1} parent=1 // loop_body
      %s29 = smul.u32 %s24, 54
      %s30 = smul.addr %s29, 4
      %s31 = scalar_lea.vmem %s0, %s30
      %v32 = vld [vmem:[%s31] sm:$0xf]
      %v33 = vld [vmem:[%s31 + $0x4] sm:$0xf]
      %v34 = vld [vmem:[%s31 + $0xc] sm:$0xf]
      %v35 = vld [vmem:[%s31 + $0x10] sm:$0xf]
      %v36 = vld [vmem:[%s31 + $0x18] sm:$0xf]
      %v37 = vld [vmem:[%s31 + $0x1c] sm:$0xf]
      %v38 = vld [vmem:[%s31 + $0x24] sm:$0xf]
      %v39 = vld [vmem:[%s31 + $0x28] sm:$0xf]
      %v40 = vld [vmem:[%s31 + $0x30] sm:$0xf]
      %v41 = vld [vmem:[%s31 + $0x34] sm:$0xf]
      %v42 = vld [vmem:[%s31 + $0x3c] sm:$0xf]
      %v43 = vld [vmem:[%s31 + $0x40] sm:$0xf]
      %v44 = vld [vmem:[%s31 + $0x48] sm:$0xf]
      %v45 = vld [vmem:[%s31 + $0x4c] sm:$0xf]
      %v46 = vld [vmem:[%s31 + $0x54] sm:$0xf]
      %v47 = vld [vmem:[%s31 + $0x58] sm:$0xf]
      %v48 = vld [vmem:[%s31 + $0x60] sm:$0xf]
      %v49 = vld [vmem:[%s31 + $0x64] sm:$0xf]
      %v50 = vld [vmem:[%s31 + $0x6c] sm:$0xf]
      %v51 = vld [vmem:[%s31 + $0x70] sm:$0xf]
      %v52 = vld [vmem:[%s31 + $0x78] sm:$0xf]
      %v53 = vld [vmem:[%s31 + $0x7c] sm:$0xf]
      %v54 = vld [vmem:[%s31 + $0x84] sm:$0xf]
      %v55 = vld [vmem:[%s31 + $0x88] sm:$0xf]
      %v56 = vld [vmem:[%s31 + $0x90] sm:$0xf]
      %v57 = vld [vmem:[%s31 + $0x94] sm:$0xf]
      %v58 = vld [vmem:[%s31 + $0x9c] sm:$0xf]
      %v59 = vld [vmem:[%s31 + $0xa0] sm:$0xf]
      %v60 = vld [vmem:[%s31 + $0xa8] sm:$0xf]
      %v61 = vld [vmem:[%s31 + $0xac] sm:$0xf]
      %v62 = vld [vmem:[%s31 + $0xb4] sm:$0xf]
      %v63 = vld [vmem:[%s31 + $0xb8] sm:$0xf]
      %v64 = vld [vmem:[%s1] sm:$0xf]
      %v65 = vld [vmem:[%s31 + $0x8] sm:$0x1]
      %v66 = vld [vmem:[%s31 + $0x14] sm:$0x1]
      %v67 = vld [vmem:[%s31 + $0x20] sm:$0x1]
      %v68 = vld [vmem:[%s31 + $0x2c] sm:$0x1]
      %v69 = vld [vmem:[%s31 + $0x38] sm:$0x1]
      %v70 = vld [vmem:[%s31 + $0x44] sm:$0x1]
      %v71 = vld [vmem:[%s31 + $0x50] sm:$0x1]
      %v72 = vld [vmem:[%s31 + $0x5c] sm:$0x1]
      %v73 = vld [vmem:[%s31 + $0x68] sm:$0x1]
      %v74 = vld [vmem:[%s31 + $0x74] sm:$0x1]
      %v75 = vld [vmem:[%s31 + $0x80] sm:$0x1]
      %v76 = vld [vmem:[%s31 + $0x8c] sm:$0x1]
      %v77 = vld [vmem:[%s31 + $0x98] sm:$0x1]
      %v78 = vld [vmem:[%s31 + $0xa4] sm:$0x1]
      %v79 = vld [vmem:[%s31 + $0xb0] sm:$0x1]
      %v80 = vld [vmem:[%s31 + $0xbc] sm:$0x1]
      %vm81 = vsmask.f32 3328
      %vm82 = vsmask.f32 7440
      %vm83 = vmor %vm81, %vm82
      %v85 = vshrl.u32 %v32, 16
      %v87 = vrot.slane %v85, 4
      %v88 = vshll.u32 %v32, 16
      %v90 = vrot.slane %v88, 5
      %v91 = vor.u32 %v87, %v90
      %v92 = vrot.slane %v91, 4
      %v94 = vshll.u32 %v33, 16
      %v96 = vrot.slane %v94, 5
      %v97 = vsel %vm83, %v92, %v96
      %v98 = vshrl.u32 %v33, 16
      %v100 = vrot.slane %v98, 4
      %v101 = vor.u32 %v100, %v96
      %v102 = vrot.slane %v101, 4
      %v104 = vshll.u32 %v65, 16
      %v106 = vrot.slane %v104, 5
      %v107 = vsel %vm83, %v102, %v106
      %v109 = vshrl.u32 %v34, 16
      %v111 = vrot.slane %v109, 4
      %v112 = vshll.u32 %v34, 16
      %v114 = vrot.slane %v112, 5
      %v115 = vor.u32 %v111, %v114
      %v116 = vrot.slane %v115, 4
      %v118 = vshll.u32 %v35, 16
      %v120 = vrot.slane %v118, 5
      %v121 = vsel %vm83, %v116, %v120
      %v122 = vshrl.u32 %v35, 16
      %v124 = vrot.slane %v122, 4
      %v125 = vor.u32 %v124, %v120
      %v126 = vrot.slane %v125, 4
      %v128 = vshll.u32 %v66, 16
      %v130 = vrot.slane %v128, 5
      %v131 = vsel %vm83, %v126, %v130
      %v133 = vshrl.u32 %v36, 16
      %v135 = vrot.slane %v133, 4
      %v136 = vshll.u32 %v36, 16
      %v138 = vrot.slane %v136, 5
      %v139 = vor.u32 %v135, %v138
      %v140 = vrot.slane %v139, 4
      %v142 = vshll.u32 %v37, 16
      %v144 = vrot.slane %v142, 5
      %v145 = vsel %vm83, %v140, %v144
      %v146 = vshrl.u32 %v37, 16
      %v148 = vrot.slane %v146, 4
      %v149 = vor.u32 %v148, %v144
      %v150 = vrot.slane %v149, 4
      %v152 = vshll.u32 %v67, 16
      %v154 = vrot.slane %v152, 5
      %v155 = vsel %vm83, %v150, %v154
      %v157 = vshrl.u32 %v38, 16
      %v159 = vrot.slane %v157, 4
      %v160 = vshll.u32 %v38, 16
      %v162 = vrot.slane %v160, 5
      %v163 = vor.u32 %v159, %v162
      %v164 = vrot.slane %v163, 4
      %v166 = vshll.u32 %v39, 16
      %v168 = vrot.slane %v166, 5
      %v169 = vsel %vm83, %v164, %v168
      %v170 = vshrl.u32 %v39, 16
      %v172 = vrot.slane %v170, 4
      %v173 = vor.u32 %v172, %v168
      %v174 = vrot.slane %v173, 4
      %v176 = vshll.u32 %v68, 16
      %v178 = vrot.slane %v176, 5
      %v179 = vsel %vm83, %v174, %v178
      %v181 = vshrl.u32 %v40, 16
      %v183 = vrot.slane %v181, 4
      %v184 = vshll.u32 %v40, 16
      %v186 = vrot.slane %v184, 5
      %v187 = vor.u32 %v183, %v186
      %v188 = vrot.slane %v187, 4
      %v190 = vshll.u32 %v41, 16
      %v192 = vrot.slane %v190, 5
      %v193 = vsel %vm83, %v188, %v192
      %v194 = vshrl.u32 %v41, 16
      %v196 = vrot.slane %v194, 4
      %v197 = vor.u32 %v196, %v192
      %v198 = vrot.slane %v197, 4
      %v200 = vshll.u32 %v69, 16
      %v202 = vrot.slane %v200, 5
      %v203 = vsel %vm83, %v198, %v202
      %v205 = vshrl.u32 %v42, 16
      %v207 = vrot.slane %v205, 4
      %v208 = vshll.u32 %v42, 16
      %v210 = vrot.slane %v208, 5
      %v211 = vor.u32 %v207, %v210
      %v212 = vrot.slane %v211, 4
      %v214 = vshll.u32 %v43, 16
      %v216 = vrot.slane %v214, 5
      %v217 = vsel %vm83, %v212, %v216
      %v218 = vshrl.u32 %v43, 16
      %v220 = vrot.slane %v218, 4
      %v221 = vor.u32 %v220, %v216
      %v222 = vrot.slane %v221, 4
      %v224 = vshll.u32 %v70, 16
      %v226 = vrot.slane %v224, 5
      %v227 = vsel %vm83, %v222, %v226
      %v229 = vshrl.u32 %v44, 16
      %v231 = vrot.slane %v229, 4
      %v232 = vshll.u32 %v44, 16
      %v234 = vrot.slane %v232, 5
      %v235 = vor.u32 %v231, %v234
      %v236 = vrot.slane %v235, 4
      %v238 = vshll.u32 %v45, 16
      %v240 = vrot.slane %v238, 5
      %v241 = vsel %vm83, %v236, %v240
      %v242 = vshrl.u32 %v45, 16
      %v244 = vrot.slane %v242, 4
      %v245 = vor.u32 %v244, %v240
      %v246 = vrot.slane %v245, 4
      %v248 = vshll.u32 %v71, 16
      %v250 = vrot.slane %v248, 5
      %v251 = vsel %vm83, %v246, %v250
      %v253 = vshrl.u32 %v46, 16
      %v255 = vrot.slane %v253, 4
      %v256 = vshll.u32 %v46, 16
      %v258 = vrot.slane %v256, 5
      %v259 = vor.u32 %v255, %v258
      %v260 = vrot.slane %v259, 4
      %v262 = vshll.u32 %v47, 16
      %v264 = vrot.slane %v262, 5
      %v265 = vsel %vm83, %v260, %v264
      %v266 = vshrl.u32 %v47, 16
      %v268 = vrot.slane %v266, 4
      %v269 = vor.u32 %v268, %v264
      %v270 = vrot.slane %v269, 4
      %v272 = vshll.u32 %v72, 16
      %v274 = vrot.slane %v272, 5
      %v275 = vsel %vm83, %v270, %v274
      %v277 = vshrl.u32 %v48, 16
      %v279 = vrot.slane %v277, 4
      %v280 = vshll.u32 %v48, 16
      %v282 = vrot.slane %v280, 5
      %v283 = vor.u32 %v279, %v282
      %v284 = vrot.slane %v283, 4
      %v286 = vshll.u32 %v49, 16
      %v288 = vrot.slane %v286, 5
      %v289 = vsel %vm83, %v284, %v288
      %v290 = vshrl.u32 %v49, 16
      %v292 = vrot.slane %v290, 4
      %v293 = vor.u32 %v292, %v288
      %v294 = vrot.slane %v293, 4
      %v296 = vshll.u32 %v73, 16
      %v298 = vrot.slane %v296, 5
      %v299 = vsel %vm83, %v294, %v298
      %v301 = vshrl.u32 %v50, 16
      %v303 = vrot.slane %v301, 4
      %v304 = vshll.u32 %v50, 16
      %v306 = vrot.slane %v304, 5
      %v307 = vor.u32 %v303, %v306
      %v308 = vrot.slane %v307, 4
      %v310 = vshll.u32 %v51, 16
      %v312 = vrot.slane %v310, 5
      %v313 = vsel %vm83, %v308, %v312
      %v314 = vshrl.u32 %v51, 16
      %v316 = vrot.slane %v314, 4
      %v317 = vor.u32 %v316, %v312
      %v318 = vrot.slane %v317, 4
      %v320 = vshll.u32 %v74, 16
      %v322 = vrot.slane %v320, 5
      %v323 = vsel %vm83, %v318, %v322
      %v325 = vshrl.u32 %v52, 16
      %v327 = vrot.slane %v325, 4
      %v328 = vshll.u32 %v52, 16
      %v330 = vrot.slane %v328, 5
      %v331 = vor.u32 %v327, %v330
      %v332 = vrot.slane %v331, 4
      %v334 = vshll.u32 %v53, 16
      %v336 = vrot.slane %v334, 5
      %v337 = vsel %vm83, %v332, %v336
      %v338 = vshrl.u32 %v53, 16
      %v340 = vrot.slane %v338, 4
      %v341 = vor.u32 %v340, %v336
      %v342 = vrot.slane %v341, 4
      %v344 = vshll.u32 %v75, 16
      %v346 = vrot.slane %v344, 5
      %v347 = vsel %vm83, %v342, %v346
      %v349 = vshrl.u32 %v54, 16
      %v351 = vrot.slane %v349, 4
      %v352 = vshll.u32 %v54, 16
      %v354 = vrot.slane %v352, 5
      %v355 = vor.u32 %v351, %v354
      %v356 = vrot.slane %v355, 4
      %v358 = vshll.u32 %v55, 16
      %v360 = vrot.slane %v358, 5
      %v361 = vsel %vm83, %v356, %v360
      %v362 = vshrl.u32 %v55, 16
      %v364 = vrot.slane %v362, 4
      %v365 = vor.u32 %v364, %v360
      %v366 = vrot.slane %v365, 4
      %v368 = vshll.u32 %v76, 16
      %v370 = vrot.slane %v368, 5
      %v371 = vsel %vm83, %v366, %v370
      %v373 = vshrl.u32 %v56, 16
      %v375 = vrot.slane %v373, 4
      %v376 = vshll.u32 %v56, 16
      %v378 = vrot.slane %v376, 5
      %v379 = vor.u32 %v375, %v378
      %v380 = vrot.slane %v379, 4
      %v382 = vshll.u32 %v57, 16
      %v384 = vrot.slane %v382, 5
      %v385 = vsel %vm83, %v380, %v384
      %v386 = vshrl.u32 %v57, 16
      %v388 = vrot.slane %v386, 4
      %v389 = vor.u32 %v388, %v384
      %v390 = vrot.slane %v389, 4
      %v392 = vshll.u32 %v77, 16
      %v394 = vrot.slane %v392, 5
      %v395 = vsel %vm83, %v390, %v394
      %v397 = vshrl.u32 %v58, 16
      %v399 = vrot.slane %v397, 4
      %v400 = vshll.u32 %v58, 16
      %v402 = vrot.slane %v400, 5
      %v403 = vor.u32 %v399, %v402
      %v404 = vrot.slane %v403, 4
      %v406 = vshll.u32 %v59, 16
      %v408 = vrot.slane %v406, 5
      %v409 = vsel %vm83, %v404, %v408
      %v410 = vshrl.u32 %v59, 16
      %v412 = vrot.slane %v410, 4
      %v413 = vor.u32 %v412, %v408
      %v414 = vrot.slane %v413, 4
      %v416 = vshll.u32 %v78, 16
      %v418 = vrot.slane %v416, 5
      %v419 = vsel %vm83, %v414, %v418
      %v421 = vshrl.u32 %v60, 16
      %v423 = vrot.slane %v421, 4
      %v424 = vshll.u32 %v60, 16
      %v426 = vrot.slane %v424, 5
      %v427 = vor.u32 %v423, %v426
      %v428 = vrot.slane %v427, 4
      %v430 = vshll.u32 %v61, 16
      %v432 = vrot.slane %v430, 5
      %v433 = vsel %vm83, %v428, %v432
      %v434 = vshrl.u32 %v61, 16
      %v436 = vrot.slane %v434, 4
      %v437 = vor.u32 %v436, %v432
      %v438 = vrot.slane %v437, 4
      %v440 = vshll.u32 %v79, 16
      %v442 = vrot.slane %v440, 5
      %v443 = vsel %vm83, %v438, %v442
      %v445 = vshrl.u32 %v62, 16
      %v447 = vrot.slane %v445, 4
      %v448 = vshll.u32 %v62, 16
      %v450 = vrot.slane %v448, 5
      %v451 = vor.u32 %v447, %v450
      %v452 = vrot.slane %v451, 4
      %v454 = vshll.u32 %v63, 16
      %v456 = vrot.slane %v454, 5
      %v457 = vsel %vm83, %v452, %v456
      %v458 = vshrl.u32 %v63, 16
      %v460 = vrot.slane %v458, 4
      %v461 = vor.u32 %v460, %v456
      %v462 = vrot.slane %v461, 4
      %v464 = vshll.u32 %v80, 16
      %v466 = vrot.slane %v464, 5
      %v467 = vsel %vm83, %v462, %v466
      %s468 = scalar_lea.vmem %s1, 4
      %v469 = vld [vmem:[%s468] sm:$0xf]
      %v470 = vunpack.c.l.b16 %v97
      %v471 = vunpack.c.l.b16 %v107
      %v472 = vunpack.c.l.b16 %v121
      %v473 = vunpack.c.l.b16 %v131
      %v474 = vunpack.c.l.b16 %v145
      %v475 = vunpack.c.l.b16 %v155
      %v476 = vunpack.c.l.b16 %v169
      %v477 = vunpack.c.l.b16 %v179
      %v478 = vunpack.c.l.b16 %v193
      %v479 = vunpack.c.l.b16 %v203
      %v480 = vunpack.c.l.b16 %v217
      %v481 = vunpack.c.l.b16 %v227
      %v482 = vunpack.c.l.b16 %v241
      %v483 = vunpack.c.l.b16 %v251
      %v484 = vunpack.c.l.b16 %v265
      %v485 = vunpack.c.l.b16 %v275
      %v486 = vunpack.c.l.b16 %v289
      %v487 = vunpack.c.l.b16 %v299
      %v488 = vunpack.c.l.b16 %v313
      %v489 = vunpack.c.l.b16 %v323
      %v490 = vunpack.c.l.b16 %v337
      %v491 = vunpack.c.l.b16 %v347
      %v492 = vunpack.c.l.b16 %v361
      %v493 = vunpack.c.l.b16 %v371
      %v494 = vunpack.c.l.b16 %v385
      %v495 = vunpack.c.l.b16 %v395
      %v496 = vunpack.c.l.b16 %v409
      %v497 = vunpack.c.l.b16 %v419
      %v498 = vunpack.c.l.b16 %v433
      %v499 = vunpack.c.l.b16 %v443
      %v500 = vunpack.c.l.b16 %v457
      %v501 = vunpack.c.l.b16 %v467
      %v502 = vpack.c.b16 %v471, %v470
      %v503 = vpack.c.b16 %v473, %v472
      %v504 = vpack.c.b16 %v475, %v474
      %v505 = vpack.c.b16 %v477, %v476
      %v506 = vpack.c.b16 %v479, %v478
      %v507 = vpack.c.b16 %v481, %v480
      %v508 = vpack.c.b16 %v483, %v482
      %v509 = vpack.c.b16 %v485, %v484
      %v510 = vpack.c.b16 %v487, %v486
      %v511 = vpack.c.b16 %v489, %v488
      %v512 = vpack.c.b16 %v491, %v490
      %v513 = vpack.c.b16 %v493, %v492
      %v514 = vpack.c.b16 %v495, %v494
      %v515 = vpack.c.b16 %v497, %v496
      %v516 = vpack.c.b16 %v499, %v498
      %v517 = vpack.c.b16 %v501, %v500
      %vm518 = vcmask 31744
      %v520 = vsel %vm518, %v469, 0
      %v523 = vsel %vm518, %v502, 0
      %v526 = vsel %vm518, %v503, 0
      %v529 = vsel %vm518, %v504, 0
      %v532 = vsel %vm518, %v505, 0
      %v535 = vsel %vm518, %v506, 0
      %v538 = vsel %vm518, %v507, 0
      %v541 = vsel %vm518, %v508, 0
      %v544 = vsel %vm518, %v509, 0
      %v547 = vsel %vm518, %v510, 0
      %v550 = vsel %vm518, %v511, 0
      %v553 = vsel %vm518, %v512, 0
      %v556 = vsel %vm518, %v513, 0
      %v559 = vsel %vm518, %v514, 0
      %v562 = vsel %vm518, %v515, 0
      %v565 = vsel %vm518, %v516, 0
      %v568 = vsel %vm518, %v517, 0
      %570 = vmatprep.subr.bf16.mxu0 0
      %571 = vmatpush1.bf16.xpose.msra.mxu0 %v523
      %572 = vmatprep.subr.bf16.mxu0 0
      %573 = vmatpush1.bf16.xpose.msra.mxu0 %v526
      %574 = vmatprep.subr.bf16.mxu0 0
      %575 = vmatpush1.bf16.xpose.msra.mxu0 %v529
      %576 = vmatprep.subr.bf16.mxu0 0
      %577 = vmatpush1.bf16.xpose.msra.mxu0 %v532
      %578 = vmatprep.subr.bf16.mxu0 0
      %579 = vmatpush1.bf16.xpose.msra.mxu0 %v535
      %580 = vmatprep.subr.bf16.mxu0 0
      %581 = vmatpush1.bf16.xpose.msra.mxu0 %v538
      %582 = vmatprep.subr.bf16.mxu0 0
      %583 = vmatpush1.bf16.xpose.msra.mxu0 %v541
      %584 = vmatprep.subr.bf16.mxu0 0
      %585 = vmatpush1.bf16.xpose.msra.mxu0 %v544
      %586 = vmatprep.subr.bf16.mxu0 0
      %587 = vmatpush1.bf16.xpose.msra.mxu0 %v547
      %588 = vmatprep.subr.bf16.mxu0 0
      %589 = vmatpush1.bf16.xpose.msra.mxu0 %v550
      %590 = vmatprep.subr.bf16.mxu0 0
      %591 = vmatpush1.bf16.xpose.msra.mxu0 %v553
      %592 = vmatprep.subr.bf16.mxu0 0
      %593 = vmatpush1.bf16.xpose.msra.mxu0 %v556
      %594 = vmatprep.subr.bf16.mxu0 0
      %595 = vmatpush1.bf16.xpose.msra.mxu0 %v559
      %596 = vmatprep.subr.bf16.mxu0 0
      %597 = vmatpush1.bf16.xpose.msra.mxu0 %v562
      %598 = vmatprep.subr.bf16.mxu0 0
      %599 = vmatpush1.bf16.xpose.msra.mxu0 %v565
      %600 = vmatprep.subr.bf16.mxu0 0
      %601 = vmatpush1.bf16.xpose.msra.mxu0 %v568
      %602 = vmatprep.mubr.bf16.mxu0 0
      %603 = vmatmul.mubr.bf16.gmra.mrb[0].mxu0 %v520
      %v604 = vpop.f32.mrb[0].mxu0
      %v605 = vadd.f32 0.0, %v604
      %v606 = vpop.f32.mrb[0].mxu0
      %v607 = vadd.f32 0.0, %v606
      %v608 = vpop.f32.mrb[0].mxu0
      %v609 = vpop.f32.mrb[0].mxu0
      %610 = vdwg.mxu0
      %v643 = vunpack.c.l.b16 %v32
      %v644 = vunpack.c.l.b16 %v33
      %v645 = vunpack.c.l.b16 %v34
      %v646 = vunpack.c.l.b16 %v35
      %v647 = vunpack.c.l.b16 %v36
      %v648 = vunpack.c.l.b16 %v37
      %v649 = vunpack.c.l.b16 %v38
      %v650 = vunpack.c.l.b16 %v39
      %v651 = vunpack.c.l.b16 %v40
      %v652 = vunpack.c.l.b16 %v41
      %v653 = vunpack.c.l.b16 %v42
      %v654 = vunpack.c.l.b16 %v43
      %v655 = vunpack.c.l.b16 %v44
      %v656 = vunpack.c.l.b16 %v45
      %v657 = vunpack.c.l.b16 %v46
      %v658 = vunpack.c.l.b16 %v47
      %v659 = vunpack.c.l.b16 %v48
      %v660 = vunpack.c.l.b16 %v49
      %v661 = vunpack.c.l.b16 %v50
      %v662 = vunpack.c.l.b16 %v51
      %v663 = vunpack.c.l.b16 %v52
      %v664 = vunpack.c.l.b16 %v53
      %v665 = vunpack.c.l.b16 %v54
      %v666 = vunpack.c.l.b16 %v55
      %v667 = vunpack.c.l.b16 %v56
      %v668 = vunpack.c.l.b16 %v57
      %v669 = vunpack.c.l.b16 %v58
      %v670 = vunpack.c.l.b16 %v59
      %v671 = vunpack.c.l.b16 %v60
      %v672 = vunpack.c.l.b16 %v61
      %v673 = vunpack.c.l.b16 %v62
      %v674 = vunpack.c.l.b16 %v63
      %v675 = vpack.c.b16 %v644, %v643
      %v676 = vpack.c.b16 %v646, %v645
      %v677 = vpack.c.b16 %v648, %v647
      %v678 = vpack.c.b16 %v650, %v649
      %v679 = vpack.c.b16 %v652, %v651
      %v680 = vpack.c.b16 %v654, %v653
      %v681 = vpack.c.b16 %v656, %v655
      %v682 = vpack.c.b16 %v658, %v657
      %v683 = vpack.c.b16 %v660, %v659
      %v684 = vpack.c.b16 %v662, %v661
      %v685 = vpack.c.b16 %v664, %v663
      %v686 = vpack.c.b16 %v666, %v665
      %v687 = vpack.c.b16 %v668, %v667
      %v688 = vpack.c.b16 %v670, %v669
      %v689 = vpack.c.b16 %v672, %v671
      %v690 = vpack.c.b16 %v674, %v673
      %v692 = vsel %vm518, %v64, 0
      %v695 = vsel %vm518, %v675, 0
      %v698 = vsel %vm518, %v676, 0
      %v701 = vsel %vm518, %v677, 0
      %v704 = vsel %vm518, %v678, 0
      %v707 = vsel %vm518, %v679, 0
      %v710 = vsel %vm518, %v680, 0
      %v713 = vsel %vm518, %v681, 0
      %v716 = vsel %vm518, %v682, 0
      %v719 = vsel %vm518, %v683, 0
      %v722 = vsel %vm518, %v684, 0
      %v725 = vsel %vm518, %v685, 0
      %v728 = vsel %vm518, %v686, 0
      %v731 = vsel %vm518, %v687, 0
      %v734 = vsel %vm518, %v688, 0
      %v737 = vsel %vm518, %v689, 0
      %v740 = vsel %vm518, %v690, 0
      %742 = vmatprep.subr.bf16.mxu0 0
      %743 = vmatpush1.bf16.xpose.msra.mxu0 %v695
      %744 = vmatprep.subr.bf16.mxu0 0
      %745 = vmatpush1.bf16.xpose.msra.mxu0 %v698
      %746 = vmatprep.subr.bf16.mxu0 0
      %747 = vmatpush1.bf16.xpose.msra.mxu0 %v701
      %748 = vmatprep.subr.bf16.mxu0 0
      %749 = vmatpush1.bf16.xpose.msra.mxu0 %v704
      %750 = vmatprep.subr.bf16.mxu0 0
      %751 = vmatpush1.bf16.xpose.msra.mxu0 %v707
      %752 = vmatprep.subr.bf16.mxu0 0
      %753 = vmatpush1.bf16.xpose.msra.mxu0 %v710
      %754 = vmatprep.subr.bf16.mxu0 0
      %755 = vmatpush1.bf16.xpose.msra.mxu0 %v713
      %756 = vmatprep.subr.bf16.mxu0 0
      %757 = vmatpush1.bf16.xpose.msra.mxu0 %v716
      %758 = vmatprep.subr.bf16.mxu0 0
      %759 = vmatpush1.bf16.xpose.msra.mxu0 %v719
      %760 = vmatprep.subr.bf16.mxu0 0
      %761 = vmatpush1.bf16.xpose.msra.mxu0 %v722
      %762 = vmatprep.subr.bf16.mxu0 0
      %763 = vmatpush1.bf16.xpose.msra.mxu0 %v725
      %764 = vmatprep.subr.bf16.mxu0 0
      %765 = vmatpush1.bf16.xpose.msra.mxu0 %v728
      %766 = vmatprep.subr.bf16.mxu0 0
      %767 = vmatpush1.bf16.xpose.msra.mxu0 %v731
      %768 = vmatprep.subr.bf16.mxu0 0
      %769 = vmatpush1.bf16.xpose.msra.mxu0 %v734
      %770 = vmatprep.subr.bf16.mxu0 0
      %771 = vmatpush1.bf16.xpose.msra.mxu0 %v737
      %772 = vmatprep.subr.bf16.mxu0 0
      %773 = vmatpush1.bf16.xpose.msra.mxu0 %v740
      %774 = vmatprep.mubr.bf16.mxu0 0
      %775 = vmatmul.mubr.bf16.gmra.mrb[0].mxu0 %v692
      %v776 = vpop.f32.mrb[0].mxu0
      %v777 = vadd.f32 %v605, %v776
      %v778 = vpop.f32.mrb[0].mxu0
      %v779 = vadd.f32 %v607, %v778
      %v780 = vpop.f32.mrb[0].mxu0
      %v781 = vpop.f32.mrb[0].mxu0
      %782 = vdwg.mxu0
      %v783 = vld [vmem:[%s31] sm:$0xe]
      %v784 = vld [vmem:[%s31 + $0xc] sm:$0xe]
      %v785 = vld [vmem:[%s31 + $0x18] sm:$0xe]
      %v786 = vld [vmem:[%s31 + $0x24] sm:$0xe]
      %v787 = vld [vmem:[%s31 + $0x30] sm:$0xe]
      %v788 = vld [vmem:[%s31 + $0x3c] sm:$0xe]
      %v789 = vld [vmem:[%s31 + $0x48] sm:$0xe]
      %v790 = vld [vmem:[%s31 + $0x54] sm:$0xe]
      %v791 = vld [vmem:[%s31 + $0x60] sm:$0xe]
      %v792 = vld [vmem:[%s31 + $0x6c] sm:$0xe]
      %v793 = vld [vmem:[%s31 + $0x78] sm:$0xe]
      %v794 = vld [vmem:[%s31 + $0x84] sm:$0xe]
      %v795 = vld [vmem:[%s31 + $0x90] sm:$0xe]
      %v796 = vld [vmem:[%s31 + $0x9c] sm:$0xe]
      %v797 = vld [vmem:[%s31 + $0xa8] sm:$0xe]
      %v798 = vld [vmem:[%s31 + $0xb4] sm:$0xe]
      %vm831 = vcmask 1042432
      %vm832 = vcmask 1046532
      %vm833 = vmor %vm831, %vm832
      %v834 = vrot.slane %v783, 5
      %v835 = vrot.slane %v834, 4
      %v836 = vrot.slane %v33, 5
      %v837 = vsel %vm833, %v835, %v836
      %v838 = vrot.slane %v836, 4
      %v839 = vrot.slane %v65, 5
      %v840 = vsel %vm833, %v838, %v839
      %v841 = vrot.slane %v784, 5
      %v842 = vrot.slane %v841, 4
      %v843 = vrot.slane %v35, 5
      %v844 = vsel %vm833, %v842, %v843
      %v845 = vrot.slane %v843, 4
      %v846 = vrot.slane %v66, 5
      %v847 = vsel %vm833, %v845, %v846
      %v848 = vrot.slane %v785, 5
      %v849 = vrot.slane %v848, 4
      %v850 = vrot.slane %v37, 5
      %v851 = vsel %vm833, %v849, %v850
      %v852 = vrot.slane %v850, 4
      %v853 = vrot.slane %v67, 5
      %v854 = vsel %vm833, %v852, %v853
      %v855 = vrot.slane %v786, 5
      %v856 = vrot.slane %v855, 4
      %v857 = vrot.slane %v39, 5
      %v858 = vsel %vm833, %v856, %v857
      %v859 = vrot.slane %v857, 4
      %v860 = vrot.slane %v68, 5
      %v861 = vsel %vm833, %v859, %v860
      %v862 = vrot.slane %v787, 5
      %v863 = vrot.slane %v862, 4
      %v864 = vrot.slane %v41, 5
      %v865 = vsel %vm833, %v863, %v864
      %v866 = vrot.slane %v864, 4
      %v867 = vrot.slane %v69, 5
      %v868 = vsel %vm833, %v866, %v867
      %v869 = vrot.slane %v788, 5
      %v870 = vrot.slane %v869, 4
      %v871 = vrot.slane %v43, 5
      %v872 = vsel %vm833, %v870, %v871
      %v873 = vrot.slane %v871, 4
      %v874 = vrot.slane %v70, 5
      %v875 = vsel %vm833, %v873, %v874
      %v876 = vrot.slane %v789, 5
      %v877 = vrot.slane %v876, 4
      %v878 = vrot.slane %v45, 5
      %v879 = vsel %vm833, %v877, %v878
      %v880 = vrot.slane %v878, 4
      %v881 = vrot.slane %v71, 5
      %v882 = vsel %vm833, %v880, %v881
      %v883 = vrot.slane %v790, 5
      %v884 = vrot.slane %v883, 4
      %v885 = vrot.slane %v47, 5
      %v886 = vsel %vm833, %v884, %v885
      %v887 = vrot.slane %v885, 4
      %v888 = vrot.slane %v72, 5
      %v889 = vsel %vm833, %v887, %v888
      %v890 = vrot.slane %v791, 5
      %v891 = vrot.slane %v890, 4
      %v892 = vrot.slane %v49, 5
      %v893 = vsel %vm833, %v891, %v892
      %v894 = vrot.slane %v892, 4
      %v895 = vrot.slane %v73, 5
      %v896 = vsel %vm833, %v894, %v895
      %v897 = vrot.slane %v792, 5
      %v898 = vrot.slane %v897, 4
      %v899 = vrot.slane %v51, 5
      %v900 = vsel %vm833, %v898, %v899
      %v901 = vrot.slane %v899, 4
      %v902 = vrot.slane %v74, 5
      %v903 = vsel %vm833, %v901, %v902
      %v904 = vrot.slane %v793, 5
      %v905 = vrot.slane %v904, 4
      %v906 = vrot.slane %v53, 5
      %v907 = vsel %vm833, %v905, %v906
      %v908 = vrot.slane %v906, 4
      %v909 = vrot.slane %v75, 5
      %v910 = vsel %vm833, %v908, %v909
      %v911 = vrot.slane %v794, 5
      %v912 = vrot.slane %v911, 4
      %v913 = vrot.slane %v55, 5
      %v914 = vsel %vm833, %v912, %v913
      %v915 = vrot.slane %v913, 4
      %v916 = vrot.slane %v76, 5
      %v917 = vsel %vm833, %v915, %v916
      %v918 = vrot.slane %v795, 5
      %v919 = vrot.slane %v918, 4
      %v920 = vrot.slane %v57, 5
      %v921 = vsel %vm833, %v919, %v920
      %v922 = vrot.slane %v920, 4
      %v923 = vrot.slane %v77, 5
      %v924 = vsel %vm833, %v922, %v923
      %v925 = vrot.slane %v796, 5
      %v926 = vrot.slane %v925, 4
      %v927 = vrot.slane %v59, 5
      %v928 = vsel %vm833, %v926, %v927
      %v929 = vrot.slane %v927, 4
      %v930 = vrot.slane %v78, 5
      %v931 = vsel %vm833, %v929, %v930
      %v932 = vrot.slane %v797, 5
      %v933 = vrot.slane %v932, 4
      %v934 = vrot.slane %v61, 5
      %v935 = vsel %vm833, %v933, %v934
      %v936 = vrot.slane %v934, 4
      %v937 = vrot.slane %v79, 5
      %v938 = vsel %vm833, %v936, %v937
      %v939 = vrot.slane %v798, 5
      %v940 = vrot.slane %v939, 4
      %v941 = vrot.slane %v63, 5
      %v942 = vsel %vm833, %v940, %v941
      %v943 = vrot.slane %v941, 4
      %v944 = vrot.slane %v80, 5
      %v945 = vsel %vm833, %v943, %v944
      %s946 = scalar_lea.vmem %s1, 8
      %v947 = vld [vmem:[%s946] sm:$0xf]
      %v948 = vunpack.c.l.b16 %v837
      %v949 = vunpack.c.l.b16 %v840
      %v950 = vunpack.c.l.b16 %v844
      %v951 = vunpack.c.l.b16 %v847
      %v952 = vunpack.c.l.b16 %v851
      %v953 = vunpack.c.l.b16 %v854
      %v954 = vunpack.c.l.b16 %v858
      %v955 = vunpack.c.l.b16 %v861
      %v956 = vunpack.c.l.b16 %v865
      %v957 = vunpack.c.l.b16 %v868
      %v958 = vunpack.c.l.b16 %v872
      %v959 = vunpack.c.l.b16 %v875
      %v960 = vunpack.c.l.b16 %v879
      %v961 = vunpack.c.l.b16 %v882
      %v962 = vunpack.c.l.b16 %v886
      %v963 = vunpack.c.l.b16 %v889
      %v964 = vunpack.c.l.b16 %v893
      %v965 = vunpack.c.l.b16 %v896
      %v966 = vunpack.c.l.b16 %v900
      %v967 = vunpack.c.l.b16 %v903
      %v968 = vunpack.c.l.b16 %v907
      %v969 = vunpack.c.l.b16 %v910
      %v970 = vunpack.c.l.b16 %v914
      %v971 = vunpack.c.l.b16 %v917
      %v972 = vunpack.c.l.b16 %v921
      %v973 = vunpack.c.l.b16 %v924
      %v974 = vunpack.c.l.b16 %v928
      %v975 = vunpack.c.l.b16 %v931
      %v976 = vunpack.c.l.b16 %v935
      %v977 = vunpack.c.l.b16 %v938
      %v978 = vunpack.c.l.b16 %v942
      %v979 = vunpack.c.l.b16 %v945
      %v980 = vpack.c.b16 %v949, %v948
      %v981 = vpack.c.b16 %v951, %v950
      %v982 = vpack.c.b16 %v953, %v952
      %v983 = vpack.c.b16 %v955, %v954
      %v984 = vpack.c.b16 %v957, %v956
      %v985 = vpack.c.b16 %v959, %v958
      %v986 = vpack.c.b16 %v961, %v960
      %v987 = vpack.c.b16 %v963, %v962
      %v988 = vpack.c.b16 %v965, %v964
      %v989 = vpack.c.b16 %v967, %v966
      %v990 = vpack.c.b16 %v969, %v968
      %v991 = vpack.c.b16 %v971, %v970
      %v992 = vpack.c.b16 %v973, %v972
      %v993 = vpack.c.b16 %v975, %v974
      %v994 = vpack.c.b16 %v977, %v976
      %v995 = vpack.c.b16 %v979, %v978
      %v997 = vsel %vm518, %v947, 0
      %v1000 = vsel %vm518, %v980, 0
      %v1003 = vsel %vm518, %v981, 0
      %v1006 = vsel %vm518, %v982, 0
      %v1009 = vsel %vm518, %v983, 0
      %v1012 = vsel %vm518, %v984, 0
      %v1015 = vsel %vm518, %v985, 0
      %v1018 = vsel %vm518, %v986, 0
      %v1021 = vsel %vm518, %v987, 0
      %v1024 = vsel %vm518, %v988, 0
      %v1027 = vsel %vm518, %v989, 0
      %v1030 = vsel %vm518, %v990, 0
      %v1033 = vsel %vm518, %v991, 0
      %v1036 = vsel %vm518, %v992, 0
      %v1039 = vsel %vm518, %v993, 0
      %v1042 = vsel %vm518, %v994, 0
      %v1045 = vsel %vm518, %v995, 0
      %1047 = vmatprep.subr.bf16.mxu0 0
      %1048 = vmatpush1.bf16.xpose.msra.mxu0 %v1000
      %1049 = vmatprep.subr.bf16.mxu0 0
      %1050 = vmatpush1.bf16.xpose.msra.mxu0 %v1003
      %1051 = vmatprep.subr.bf16.mxu0 0
      %1052 = vmatpush1.bf16.xpose.msra.mxu0 %v1006
      %1053 = vmatprep.subr.bf16.mxu0 0
      %1054 = vmatpush1.bf16.xpose.msra.mxu0 %v1009
      %1055 = vmatprep.subr.bf16.mxu0 0
      %1056 = vmatpush1.bf16.xpose.msra.mxu0 %v1012
      %1057 = vmatprep.subr.bf16.mxu0 0
      %1058 = vmatpush1.bf16.xpose.msra.mxu0 %v1015
      %1059 = vmatprep.subr.bf16.mxu0 0
      %1060 = vmatpush1.bf16.xpose.msra.mxu0 %v1018
      %1061 = vmatprep.subr.bf16.mxu0 0
      %1062 = vmatpush1.bf16.xpose.msra.mxu0 %v1021
      %1063 = vmatprep.subr.bf16.mxu0 0
      %1064 = vmatpush1.bf16.xpose.msra.mxu0 %v1024
      %1065 = vmatprep.subr.bf16.mxu0 0
      %1066 = vmatpush1.bf16.xpose.msra.mxu0 %v1027
      %1067 = vmatprep.subr.bf16.mxu0 0
      %1068 = vmatpush1.bf16.xpose.msra.mxu0 %v1030
      %1069 = vmatprep.subr.bf16.mxu0 0
      %1070 = vmatpush1.bf16.xpose.msra.mxu0 %v1033
      %1071 = vmatprep.subr.bf16.mxu0 0
      %1072 = vmatpush1.bf16.xpose.msra.mxu0 %v1036
      %1073 = vmatprep.subr.bf16.mxu0 0
      %1074 = vmatpush1.bf16.xpose.msra.mxu0 %v1039
      %1075 = vmatprep.subr.bf16.mxu0 0
      %1076 = vmatpush1.bf16.xpose.msra.mxu0 %v1042
      %1077 = vmatprep.subr.bf16.mxu0 0
      %1078 = vmatpush1.bf16.xpose.msra.mxu0 %v1045
      %1079 = vmatprep.mubr.bf16.mxu0 0
      %1080 = vmatmul.mubr.bf16.gmra.mrb[0].mxu0 %v997
      %v1081 = vpop.f32.mrb[0].mxu0
      %v1082 = vadd.f32 0.0, %v1081
      %v1083 = vpop.f32.mrb[0].mxu0
      %v1084 = vadd.f32 0.0, %v1083
      %v1085 = vpop.f32.mrb[0].mxu0
      %v1086 = vpop.f32.mrb[0].mxu0
      %1087 = vdwg.mxu0
      %v1088 = vadd.f32 %v777, %v1082
      %v1089 = vadd.f32 %v779, %v1084
      %s1090 = sadd.s32 3, %s29
      %s1091 = smul.addr %s1090, 4
      %s1092 = scalar_lea.vmem %s0, %s1091
      %v1093 = vld [vmem:[%s1092] sm:$0xf]
      %v1094 = vld [vmem:[%s1092 + $0x4] sm:$0xf]
      %v1095 = vld [vmem:[%s1092 + $0xc] sm:$0xf]
      %v1096 = vld [vmem:[%s1092 + $0x10] sm:$0xf]
      %v1097 = vld [vmem:[%s1092 + $0x18] sm:$0xf]
      %v1098 = vld [vmem:[%s1092 + $0x1c] sm:$0xf]
      %v1099 = vld [vmem:[%s1092 + $0x24] sm:$0xf]
      %v1100 = vld [vmem:[%s1092 + $0x28] sm:$0xf]
      %v1101 = vld [vmem:[%s1092 + $0x30] sm:$0xf]
      %v1102 = vld [vmem:[%s1092 + $0x34] sm:$0xf]
      %v1103 = vld [vmem:[%s1092 + $0x3c] sm:$0xf]
      %v1104 = vld [vmem:[%s1092 + $0x40] sm:$0xf]
      %v1105 = vld [vmem:[%s1092 + $0x48] sm:$0xf]
      %v1106 = vld [vmem:[%s1092 + $0x4c] sm:$0xf]
      %v1107 = vld [vmem:[%s1092 + $0x54] sm:$0xf]
      %v1108 = vld [vmem:[%s1092 + $0x58] sm:$0xf]
      %v1109 = vld [vmem:[%s1092 + $0x60] sm:$0xf]
      %v1110 = vld [vmem:[%s1092 + $0x64] sm:$0xf]
      %v1111 = vld [vmem:[%s1092 + $0x6c] sm:$0xf]
      %v1112 = vld [vmem:[%s1092 + $0x70] sm:$0xf]
      %v1113 = vld [vmem:[%s1092 + $0x78] sm:$0xf]
      %v1114 = vld [vmem:[%s1092 + $0x7c] sm:$0xf]
      %v1115 = vld [vmem:[%s1092 + $0x84] sm:$0xf]
      %v1116 = vld [vmem:[%s1092 + $0x88] sm:$0xf]
      %v1117 = vld [vmem:[%s1092 + $0x90] sm:$0xf]
      %v1118 = vld [vmem:[%s1092 + $0x94] sm:$0xf]
      %v1119 = vld [vmem:[%s1092 + $0x9c] sm:$0xf]
      %v1120 = vld [vmem:[%s1092 + $0xa0] sm:$0xf]
      %v1121 = vld [vmem:[%s1092 + $0xa8] sm:$0xf]
      %v1122 = vld [vmem:[%s1092 + $0xac] sm:$0xf]
      %v1123 = vld [vmem:[%s1092 + $0xb4] sm:$0xf]
      %v1124 = vld [vmem:[%s1092 + $0xb8] sm:$0xf]
      %s1125 = scalar_lea.vmem %s1, 12
      %v1126 = vld [vmem:[%s1125] sm:$0xf]
      %v1159 = vunpack.c.l.b16 %v1093
      %v1160 = vunpack.c.l.b16 %v1094
      %v1161 = vunpack.c.l.b16 %v1095
      %v1162 = vunpack.c.l.b16 %v1096
      %v1163 = vunpack.c.l.b16 %v1097
      %v1164 = vunpack.c.l.b16 %v1098
      %v1165 = vunpack.c.l.b16 %v1099
      %v1166 = vunpack.c.l.b16 %v1100
      %v1167 = vunpack.c.l.b16 %v1101
      %v1168 = vunpack.c.l.b16 %v1102
      %v1169 = vunpack.c.l.b16 %v1103
      %v1170 = vunpack.c.l.b16 %v1104
      %v1171 = vunpack.c.l.b16 %v1105
      %v1172 = vunpack.c.l.b16 %v1106
      %v1173 = vunpack.c.l.b16 %v1107
      %v1174 = vunpack.c.l.b16 %v1108
      %v1175 = vunpack.c.l.b16 %v1109
      %v1176 = vunpack.c.l.b16 %v1110
      %v1177 = vunpack.c.l.b16 %v1111
      %v1178 = vunpack.c.l.b16 %v1112
      %v1179 = vunpack.c.l.b16 %v1113
      %v1180 = vunpack.c.l.b16 %v1114
      %v1181 = vunpack.c.l.b16 %v1115
      %v1182 = vunpack.c.l.b16 %v1116
      %v1183 = vunpack.c.l.b16 %v1117
      %v1184 = vunpack.c.l.b16 %v1118
      %v1185 = vunpack.c.l.b16 %v1119
      %v1186 = vunpack.c.l.b16 %v1120
      %v1187 = vunpack.c.l.b16 %v1121
      %v1188 = vunpack.c.l.b16 %v1122
      %v1189 = vunpack.c.l.b16 %v1123
      %v1190 = vunpack.c.l.b16 %v1124
      %v1191 = vpack.c.b16 %v1160, %v1159
      %v1192 = vpack.c.b16 %v1162, %v1161
      %v1193 = vpack.c.b16 %v1164, %v1163
      %v1194 = vpack.c.b16 %v1166, %v1165
      %v1195 = vpack.c.b16 %v1168, %v1167
      %v1196 = vpack.c.b16 %v1170, %v1169
      %v1197 = vpack.c.b16 %v1172, %v1171
      %v1198 = vpack.c.b16 %v1174, %v1173
      %v1199 = vpack.c.b16 %v1176, %v1175
      %v1200 = vpack.c.b16 %v1178, %v1177
      %v1201 = vpack.c.b16 %v1180, %v1179
      %v1202 = vpack.c.b16 %v1182, %v1181
      %v1203 = vpack.c.b16 %v1184, %v1183
      %v1204 = vpack.c.b16 %v1186, %v1185
      %v1205 = vpack.c.b16 %v1188, %v1187
      %v1206 = vpack.c.b16 %v1190, %v1189
      %v1208 = vsel %vm518, %v1126, 0
      %v1211 = vsel %vm518, %v1191, 0
      %v1214 = vsel %vm518, %v1192, 0
      %v1217 = vsel %vm518, %v1193, 0
      %v1220 = vsel %vm518, %v1194, 0
      %v1223 = vsel %vm518, %v1195, 0
      %v1226 = vsel %vm518, %v1196, 0
      %v1229 = vsel %vm518, %v1197, 0
      %v1232 = vsel %vm518, %v1198, 0
      %v1235 = vsel %vm518, %v1199, 0
      %v1238 = vsel %vm518, %v1200, 0
      %v1241 = vsel %vm518, %v1201, 0
      %v1244 = vsel %vm518, %v1202, 0
      %v1247 = vsel %vm518, %v1203, 0
      %v1250 = vsel %vm518, %v1204, 0
      %v1253 = vsel %vm518, %v1205, 0
      %v1256 = vsel %vm518, %v1206, 0
      %1258 = vmatprep.subr.bf16.mxu0 0
      %1259 = vmatpush1.bf16.xpose.msra.mxu0 %v1211
      %1260 = vmatprep.subr.bf16.mxu0 0
      %1261 = vmatpush1.bf16.xpose.msra.mxu0 %v1214
      %1262 = vmatprep.subr.bf16.mxu0 0
      %1263 = vmatpush1.bf16.xpose.msra.mxu0 %v1217
      %1264 = vmatprep.subr.bf16.mxu0 0
      %1265 = vmatpush1.bf16.xpose.msra.mxu0 %v1220
      %1266 = vmatprep.subr.bf16.mxu0 0
      %1267 = vmatpush1.bf16.xpose.msra.mxu0 %v1223
      %1268 = vmatprep.subr.bf16.mxu0 0
      %1269 = vmatpush1.bf16.xpose.msra.mxu0 %v1226
      %1270 = vmatprep.subr.bf16.mxu0 0
      %1271 = vmatpush1.bf16.xpose.msra.mxu0 %v1229
      %1272 = vmatprep.subr.bf16.mxu0 0
      %1273 = vmatpush1.bf16.xpose.msra.mxu0 %v1232
      %1274 = vmatprep.subr.bf16.mxu0 0
      %1275 = vmatpush1.bf16.xpose.msra.mxu0 %v1235
      %1276 = vmatprep.subr.bf16.mxu0 0
      %1277 = vmatpush1.bf16.xpose.msra.mxu0 %v1238
      %1278 = vmatprep.subr.bf16.mxu0 0
      %1279 = vmatpush1.bf16.xpose.msra.mxu0 %v1241
      %1280 = vmatprep.subr.bf16.mxu0 0
      %1281 = vmatpush1.bf16.xpose.msra.mxu0 %v1244
      %1282 = vmatprep.subr.bf16.mxu0 0
      %1283 = vmatpush1.bf16.xpose.msra.mxu0 %v1247
      %1284 = vmatprep.subr.bf16.mxu0 0
      %1285 = vmatpush1.bf16.xpose.msra.mxu0 %v1250
      %1286 = vmatprep.subr.bf16.mxu0 0
      %1287 = vmatpush1.bf16.xpose.msra.mxu0 %v1253
      %1288 = vmatprep.subr.bf16.mxu0 0
      %1289 = vmatpush1.bf16.xpose.msra.mxu0 %v1256
      %1290 = vmatprep.mubr.bf16.mxu0 0
      %1291 = vmatmul.mubr.bf16.gmra.mrb[0].mxu0 %v1208
      %v1292 = vpop.f32.mrb[0].mxu0
      %v1293 = vadd.f32 0.0, %v1292
      %v1294 = vpop.f32.mrb[0].mxu0
      %v1295 = vadd.f32 0.0, %v1294
      %v1296 = vpop.f32.mrb[0].mxu0
      %v1297 = vpop.f32.mrb[0].mxu0
      %1298 = vdwg.mxu0
      %v1299 = vadd.f32 %v1088, %v1293
      %v1300 = vadd.f32 %v1089, %v1295
      %v1301 = vld [vmem:[%s1092] sm:$0xf]
      %v1302 = vld [vmem:[%s1092 + $0x4] sm:$0xf]
      %v1303 = vld [vmem:[%s1092 + $0x8] sm:$0x1]
      %v1304 = vld [vmem:[%s1092 + $0xc] sm:$0xf]
      %v1305 = vld [vmem:[%s1092 + $0x10] sm:$0xf]
      %v1306 = vld [vmem:[%s1092 + $0x14] sm:$0x1]
      %v1307 = vld [vmem:[%s1092 + $0x18] sm:$0xf]
      %v1308 = vld [vmem:[%s1092 + $0x1c] sm:$0xf]
      %v1309 = vld [vmem:[%s1092 + $0x20] sm:$0x1]
      %v1310 = vld [vmem:[%s1092 + $0x24] sm:$0xf]
      %v1311 = vld [vmem:[%s1092 + $0x28] sm:$0xf]
      %v1312 = vld [vmem:[%s1092 + $0x2c] sm:$0x1]
      %v1313 = vld [vmem:[%s1092 + $0x30] sm:$0xf]
      %v1314 = vld [vmem:[%s1092 + $0x34] sm:$0xf]
      %v1315 = vld [vmem:[%s1092 + $0x38] sm:$0x1]
      %v1316 = vld [vmem:[%s1092 + $0x3c] sm:$0xf]
      %v1317 = vld [vmem:[%s1092 + $0x40] sm:$0xf]
      %v1318 = vld [vmem:[%s1092 + $0x44] sm:$0x1]
      %v1319 = vld [vmem:[%s1092 + $0x48] sm:$0xf]
      %v1320 = vld [vmem:[%s1092 + $0x4c] sm:$0xf]
      %v1321 = vld [vmem:[%s1092 + $0x50] sm:$0x1]
      %v1322 = vld [vmem:[%s1092 + $0x54] sm:$0xf]
      %v1323 = vld [vmem:[%s1092 + $0x58] sm:$0xf]
      %v1324 = vld [vmem:[%s1092 + $0x5c] sm:$0x1]
      %v1325 = vld [vmem:[%s1092 + $0x60] sm:$0xf]
      %v1326 = vld [vmem:[%s1092 + $0x64] sm:$0xf]
      %v1327 = vld [vmem:[%s1092 + $0x68] sm:$0x1]
      %v1328 = vld [vmem:[%s1092 + $0x6c] sm:$0xf]
      %v1329 = vld [vmem:[%s1092 + $0x70] sm:$0xf]
      %v1330 = vld [vmem:[%s1092 + $0x74] sm:$0x1]
      %v1331 = vld [vmem:[%s1092 + $0x78] sm:$0xf]
      %v1332 = vld [vmem:[%s1092 + $0x7c] sm:$0xf]
      %v1333 = vld [vmem:[%s1092 + $0x80] sm:$0x1]
      %v1334 = vld [vmem:[%s1092 + $0x84] sm:$0xf]
      %v1335 = vld [vmem:[%s1092 + $0x88] sm:$0xf]
      %v1336 = vld [vmem:[%s1092 + $0x8c] sm:$0x1]
      %v1337 = vld [vmem:[%s1092 + $0x90] sm:$0xf]
      %v1338 = vld [vmem:[%s1092 + $0x94] sm:$0xf]
      %v1339 = vld [vmem:[%s1092 + $0x98] sm:$0x1]
      %v1340 = vld [vmem:[%s1092 + $0x9c] sm:$0xf]
      %v1341 = vld [vmem:[%s1092 + $0xa0] sm:$0xf]
      %v1342 = vld [vmem:[%s1092 + $0xa4] sm:$0x1]
      %v1343 = vld [vmem:[%s1092 + $0xa8] sm:$0xf]
      %v1344 = vld [vmem:[%s1092 + $0xac] sm:$0xf]
      %v1345 = vld [vmem:[%s1092 + $0xb0] sm:$0x1]
      %v1346 = vld [vmem:[%s1092 + $0xb4] sm:$0xf]
      %v1347 = vld [vmem:[%s1092 + $0xb8] sm:$0xf]
      %v1348 = vld [vmem:[%s1092 + $0xbc] sm:$0x1]
      %v1350 = vshrl.u32 %v1301, 16
      %v1352 = vrot.slane %v1350, 4
      %v1353 = vshll.u32 %v1301, 16
      %v1355 = vrot.slane %v1353, 5
      %v1356 = vor.u32 %v1352, %v1355
      %v1357 = vrot.slane %v1356, 4
      %v1359 = vshll.u32 %v1302, 16
      %v1361 = vrot.slane %v1359, 5
      %v1362 = vsel %vm83, %v1357, %v1361
      %v1363 = vshrl.u32 %v1302, 16
      %v1365 = vrot.slane %v1363, 4
      %v1366 = vor.u32 %v1365, %v1361
      %v1367 = vrot.slane %v1366, 4
      %v1369 = vshll.u32 %v1303, 16
      %v1371 = vrot.slane %v1369, 5
      %v1372 = vsel %vm83, %v1367, %v1371
      %v1374 = vshrl.u32 %v1304, 16
      %v1376 = vrot.slane %v1374, 4
      %v1377 = vshll.u32 %v1304, 16
      %v1379 = vrot.slane %v1377, 5
      %v1380 = vor.u32 %v1376, %v1379
      %v1381 = vrot.slane %v1380, 4
      %v1383 = vshll.u32 %v1305, 16
      %v1385 = vrot.slane %v1383, 5
      %v1386 = vsel %vm83, %v1381, %v1385
      %v1387 = vshrl.u32 %v1305, 16
      %v1389 = vrot.slane %v1387, 4
      %v1390 = vor.u32 %v1389, %v1385
      %v1391 = vrot.slane %v1390, 4
      %v1393 = vshll.u32 %v1306, 16
      %v1395 = vrot.slane %v1393, 5
      %v1396 = vsel %vm83, %v1391, %v1395
      %v1398 = vshrl.u32 %v1307, 16
      %v1400 = vrot.slane %v1398, 4
      %v1401 = vshll.u32 %v1307, 16
      %v1403 = vrot.slane %v1401, 5
      %v1404 = vor.u32 %v1400, %v1403
      %v1405 = vrot.slane %v1404, 4
      %v1407 = vshll.u32 %v1308, 16
      %v1409 = vrot.slane %v1407, 5
      %v1410 = vsel %vm83, %v1405, %v1409
      %v1411 = vshrl.u32 %v1308, 16
      %v1413 = vrot.slane %v1411, 4
      %v1414 = vor.u32 %v1413, %v1409
      %v1415 = vrot.slane %v1414, 4
      %v1417 = vshll.u32 %v1309, 16
      %v1419 = vrot.slane %v1417, 5
      %v1420 = vsel %vm83, %v1415, %v1419
      %v1422 = vshrl.u32 %v1310, 16
      %v1424 = vrot.slane %v1422, 4
      %v1425 = vshll.u32 %v1310, 16
      %v1427 = vrot.slane %v1425, 5
      %v1428 = vor.u32 %v1424, %v1427
      %v1429 = vrot.slane %v1428, 4
      %v1431 = vshll.u32 %v1311, 16
      %v1433 = vrot.slane %v1431, 5
      %v1434 = vsel %vm83, %v1429, %v1433
      %v1435 = vshrl.u32 %v1311, 16
      %v1437 = vrot.slane %v1435, 4
      %v1438 = vor.u32 %v1437, %v1433
      %v1439 = vrot.slane %v1438, 4
      %v1441 = vshll.u32 %v1312, 16
      %v1443 = vrot.slane %v1441, 5
      %v1444 = vsel %vm83, %v1439, %v1443
      %v1446 = vshrl.u32 %v1313, 16
      %v1448 = vrot.slane %v1446, 4
      %v1449 = vshll.u32 %v1313, 16
      %v1451 = vrot.slane %v1449, 5
      %v1452 = vor.u32 %v1448, %v1451
      %v1453 = vrot.slane %v1452, 4
      %v1455 = vshll.u32 %v1314, 16
      %v1457 = vrot.slane %v1455, 5
      %v1458 = vsel %vm83, %v1453, %v1457
      %v1459 = vshrl.u32 %v1314, 16
      %v1461 = vrot.slane %v1459, 4
      %v1462 = vor.u32 %v1461, %v1457
      %v1463 = vrot.slane %v1462, 4
      %v1465 = vshll.u32 %v1315, 16
      %v1467 = vrot.slane %v1465, 5
      %v1468 = vsel %vm83, %v1463, %v1467
      %v1470 = vshrl.u32 %v1316, 16
      %v1472 = vrot.slane %v1470, 4
      %v1473 = vshll.u32 %v1316, 16
      %v1475 = vrot.slane %v1473, 5
      %v1476 = vor.u32 %v1472, %v1475
      %v1477 = vrot.slane %v1476, 4
      %v1479 = vshll.u32 %v1317, 16
      %v1481 = vrot.slane %v1479, 5
      %v1482 = vsel %vm83, %v1477, %v1481
      %v1483 = vshrl.u32 %v1317, 16
      %v1485 = vrot.slane %v1483, 4
      %v1486 = vor.u32 %v1485, %v1481
      %v1487 = vrot.slane %v1486, 4
      %v1489 = vshll.u32 %v1318, 16
      %v1491 = vrot.slane %v1489, 5
      %v1492 = vsel %vm83, %v1487, %v1491
      %v1494 = vshrl.u32 %v1319, 16
      %v1496 = vrot.slane %v1494, 4
      %v1497 = vshll.u32 %v1319, 16
      %v1499 = vrot.slane %v1497, 5
      %v1500 = vor.u32 %v1496, %v1499
      %v1501 = vrot.slane %v1500, 4
      %v1503 = vshll.u32 %v1320, 16
      %v1505 = vrot.slane %v1503, 5
      %v1506 = vsel %vm83, %v1501, %v1505
      %v1507 = vshrl.u32 %v1320, 16
      %v1509 = vrot.slane %v1507, 4
      %v1510 = vor.u32 %v1509, %v1505
      %v1511 = vrot.slane %v1510, 4
      %v1513 = vshll.u32 %v1321, 16
      %v1515 = vrot.slane %v1513, 5
      %v1516 = vsel %vm83, %v1511, %v1515
      %v1518 = vshrl.u32 %v1322, 16
      %v1520 = vrot.slane %v1518, 4
      %v1521 = vshll.u32 %v1322, 16
      %v1523 = vrot.slane %v1521, 5
      %v1524 = vor.u32 %v1520, %v1523
      %v1525 = vrot.slane %v1524, 4
      %v1527 = vshll.u32 %v1323, 16
      %v1529 = vrot.slane %v1527, 5
      %v1530 = vsel %vm83, %v1525, %v1529
      %v1531 = vshrl.u32 %v1323, 16
      %v1533 = vrot.slane %v1531, 4
      %v1534 = vor.u32 %v1533, %v1529
      %v1535 = vrot.slane %v1534, 4
      %v1537 = vshll.u32 %v1324, 16
      %v1539 = vrot.slane %v1537, 5
      %v1540 = vsel %vm83, %v1535, %v1539
      %v1542 = vshrl.u32 %v1325, 16
      %v1544 = vrot.slane %v1542, 4
      %v1545 = vshll.u32 %v1325, 16
      %v1547 = vrot.slane %v1545, 5
      %v1548 = vor.u32 %v1544, %v1547
      %v1549 = vrot.slane %v1548, 4
      %v1551 = vshll.u32 %v1326, 16
      %v1553 = vrot.slane %v1551, 5
      %v1554 = vsel %vm83, %v1549, %v1553
      %v1555 = vshrl.u32 %v1326, 16
      %v1557 = vrot.slane %v1555, 4
      %v1558 = vor.u32 %v1557, %v1553
      %v1559 = vrot.slane %v1558, 4
      %v1561 = vshll.u32 %v1327, 16
      %v1563 = vrot.slane %v1561, 5
      %v1564 = vsel %vm83, %v1559, %v1563
      %v1566 = vshrl.u32 %v1328, 16
      %v1568 = vrot.slane %v1566, 4
      %v1569 = vshll.u32 %v1328, 16
      %v1571 = vrot.slane %v1569, 5
      %v1572 = vor.u32 %v1568, %v1571
      %v1573 = vrot.slane %v1572, 4
      %v1575 = vshll.u32 %v1329, 16
      %v1577 = vrot.slane %v1575, 5
      %v1578 = vsel %vm83, %v1573, %v1577
      %v1579 = vshrl.u32 %v1329, 16
      %v1581 = vrot.slane %v1579, 4
      %v1582 = vor.u32 %v1581, %v1577
      %v1583 = vrot.slane %v1582, 4
      %v1585 = vshll.u32 %v1330, 16
      %v1587 = vrot.slane %v1585, 5
      %v1588 = vsel %vm83, %v1583, %v1587
      %v1590 = vshrl.u32 %v1331, 16
      %v1592 = vrot.slane %v1590, 4
      %v1593 = vshll.u32 %v1331, 16
      %v1595 = vrot.slane %v1593, 5
      %v1596 = vor.u32 %v1592, %v1595
      %v1597 = vrot.slane %v1596, 4
      %v1599 = vshll.u32 %v1332, 16
      %v1601 = vrot.slane %v1599, 5
      %v1602 = vsel %vm83, %v1597, %v1601
      %v1603 = vshrl.u32 %v1332, 16
      %v1605 = vrot.slane %v1603, 4
      %v1606 = vor.u32 %v1605, %v1601
      %v1607 = vrot.slane %v1606, 4
      %v1609 = vshll.u32 %v1333, 16
      %v1611 = vrot.slane %v1609, 5
      %v1612 = vsel %vm83, %v1607, %v1611
      %v1614 = vshrl.u32 %v1334, 16
      %v1616 = vrot.slane %v1614, 4
      %v1617 = vshll.u32 %v1334, 16
      %v1619 = vrot.slane %v1617, 5
      %v1620 = vor.u32 %v1616, %v1619
      %v1621 = vrot.slane %v1620, 4
      %v1623 = vshll.u32 %v1335, 16
      %v1625 = vrot.slane %v1623, 5
      %v1626 = vsel %vm83, %v1621, %v1625
      %v1627 = vshrl.u32 %v1335, 16
      %v1629 = vrot.slane %v1627, 4
      %v1630 = vor.u32 %v1629, %v1625
      %v1631 = vrot.slane %v1630, 4
      %v1633 = vshll.u32 %v1336, 16
      %v1635 = vrot.slane %v1633, 5
      %v1636 = vsel %vm83, %v1631, %v1635
      %v1638 = vshrl.u32 %v1337, 16
      %v1640 = vrot.slane %v1638, 4
      %v1641 = vshll.u32 %v1337, 16
      %v1643 = vrot.slane %v1641, 5
      %v1644 = vor.u32 %v1640, %v1643
      %v1645 = vrot.slane %v1644, 4
      %v1647 = vshll.u32 %v1338, 16
      %v1649 = vrot.slane %v1647, 5
      %v1650 = vsel %vm83, %v1645, %v1649
      %v1651 = vshrl.u32 %v1338, 16
      %v1653 = vrot.slane %v1651, 4
      %v1654 = vor.u32 %v1653, %v1649
      %v1655 = vrot.slane %v1654, 4
      %v1657 = vshll.u32 %v1339, 16
      %v1659 = vrot.slane %v1657, 5
      %v1660 = vsel %vm83, %v1655, %v1659
      %v1662 = vshrl.u32 %v1340, 16
      %v1664 = vrot.slane %v1662, 4
      %v1665 = vshll.u32 %v1340, 16
      %v1667 = vrot.slane %v1665, 5
      %v1668 = vor.u32 %v1664, %v1667
      %v1669 = vrot.slane %v1668, 4
      %v1671 = vshll.u32 %v1341, 16
      %v1673 = vrot.slane %v1671, 5
      %v1674 = vsel %vm83, %v1669, %v1673
      %v1675 = vshrl.u32 %v1341, 16
      %v1677 = vrot.slane %v1675, 4
      %v1678 = vor.u32 %v1677, %v1673
      %v1679 = vrot.slane %v1678, 4
      %v1681 = vshll.u32 %v1342, 16
      %v1683 = vrot.slane %v1681, 5
      %v1684 = vsel %vm83, %v1679, %v1683
      %v1686 = vshrl.u32 %v1343, 16
      %v1688 = vrot.slane %v1686, 4
      %v1689 = vshll.u32 %v1343, 16
      %v1691 = vrot.slane %v1689, 5
      %v1692 = vor.u32 %v1688, %v1691
      %v1693 = vrot.slane %v1692, 4
      %v1695 = vshll.u32 %v1344, 16
      %v1697 = vrot.slane %v1695, 5
      %v1698 = vsel %vm83, %v1693, %v1697
      %v1699 = vshrl.u32 %v1344, 16
      %v1701 = vrot.slane %v1699, 4
      %v1702 = vor.u32 %v1701, %v1697
      %v1703 = vrot.slane %v1702, 4
      %v1705 = vshll.u32 %v1345, 16
      %v1707 = vrot.slane %v1705, 5
      %v1708 = vsel %vm83, %v1703, %v1707
      %v1710 = vshrl.u32 %v1346, 16
      %v1712 = vrot.slane %v1710, 4
      %v1713 = vshll.u32 %v1346, 16
      %v1715 = vrot.slane %v1713, 5
      %v1716 = vor.u32 %v1712, %v1715
      %v1717 = vrot.slane %v1716, 4
      %v1719 = vshll.u32 %v1347, 16
      %v1721 = vrot.slane %v1719, 5
      %v1722 = vsel %vm83, %v1717, %v1721
      %v1723 = vshrl.u32 %v1347, 16
      %v1725 = vrot.slane %v1723, 4
      %v1726 = vor.u32 %v1725, %v1721
      %v1727 = vrot.slane %v1726, 4
      %v1729 = vshll.u32 %v1348, 16
      %v1731 = vrot.slane %v1729, 5
      %v1732 = vsel %vm83, %v1727, %v1731
      %s1733 = scalar_lea.vmem %s1, 16
      %v1734 = vld [vmem:[%s1733] sm:$0xf]
      %v1735 = vunpack.c.l.b16 %v1362
      %v1736 = vunpack.c.l.b16 %v1372
      %v1737 = vunpack.c.l.b16 %v1386
      %v1738 = vunpack.c.l.b16 %v1396
      %v1739 = vunpack.c.l.b16 %v1410
      %v1740 = vunpack.c.l.b16 %v1420
      %v1741 = vunpack.c.l.b16 %v1434
      %v1742 = vunpack.c.l.b16 %v1444
      %v1743 = vunpack.c.l.b16 %v1458
      %v1744 = vunpack.c.l.b16 %v1468
      %v1745 = vunpack.c.l.b16 %v1482
      %v1746 = vunpack.c.l.b16 %v1492
      %v1747 = vunpack.c.l.b16 %v1506
      %v1748 = vunpack.c.l.b16 %v1516
      %v1749 = vunpack.c.l.b16 %v1530
      %v1750 = vunpack.c.l.b16 %v1540
      %v1751 = vunpack.c.l.b16 %v1554
      %v1752 = vunpack.c.l.b16 %v1564
      %v1753 = vunpack.c.l.b16 %v1578
      %v1754 = vunpack.c.l.b16 %v1588
      %v1755 = vunpack.c.l.b16 %v1602
      %v1756 = vunpack.c.l.b16 %v1612
      %v1757 = vunpack.c.l.b16 %v1626
      %v1758 = vunpack.c.l.b16 %v1636
      %v1759 = vunpack.c.l.b16 %v1650
      %v1760 = vunpack.c.l.b16 %v1660
      %v1761 = vunpack.c.l.b16 %v1674
      %v1762 = vunpack.c.l.b16 %v1684
      %v1763 = vunpack.c.l.b16 %v1698
      %v1764 = vunpack.c.l.b16 %v1708
      %v1765 = vunpack.c.l.b16 %v1722
      %v1766 = vunpack.c.l.b16 %v1732
      %v1767 = vpack.c.b16 %v1736, %v1735
      %v1768 = vpack.c.b16 %v1738, %v1737
      %v1769 = vpack.c.b16 %v1740, %v1739
      %v1770 = vpack.c.b16 %v1742, %v1741
      %v1771 = vpack.c.b16 %v1744, %v1743
      %v1772 = vpack.c.b16 %v1746, %v1745
      %v1773 = vpack.c.b16 %v1748, %v1747
      %v1774 = vpack.c.b16 %v1750, %v1749
      %v1775 = vpack.c.b16 %v1752, %v1751
      %v1776 = vpack.c.b16 %v1754, %v1753
      %v1777 = vpack.c.b16 %v1756, %v1755
      %v1778 = vpack.c.b16 %v1758, %v1757
      %v1779 = vpack.c.b16 %v1760, %v1759
      %v1780 = vpack.c.b16 %v1762, %v1761
      %v1781 = vpack.c.b16 %v1764, %v1763
      %v1782 = vpack.c.b16 %v1766, %v1765
      %v1784 = vsel %vm518, %v1734, 0
      %v1787 = vsel %vm518, %v1767, 0
      %v1790 = vsel %vm518, %v1768, 0
      %v1793 = vsel %vm518, %v1769, 0
      %v1796 = vsel %vm518, %v1770, 0
      %v1799 = vsel %vm518, %v1771, 0
      %v1802 = vsel %vm518, %v1772, 0
      %v1805 = vsel %vm518, %v1773, 0
      %v1808 = vsel %vm518, %v1774, 0
      %v1811 = vsel %vm518, %v1775, 0
      %v1814 = vsel %vm518, %v1776, 0
      %v1817 = vsel %vm518, %v1777, 0
      %v1820 = vsel %vm518, %v1778, 0
      %v1823 = vsel %vm518, %v1779, 0
      %v1826 = vsel %vm518, %v1780, 0
      %v1829 = vsel %vm518, %v1781, 0
      %v1832 = vsel %vm518, %v1782, 0
      %1834 = vmatprep.subr.bf16.mxu0 0
      %1835 = vmatpush1.bf16.xpose.msra.mxu0 %v1787
      %1836 = vmatprep.subr.bf16.mxu0 0
      %1837 = vmatpush1.bf16.xpose.msra.mxu0 %v1790
      %1838 = vmatprep.subr.bf16.mxu0 0
      %1839 = vmatpush1.bf16.xpose.msra.mxu0 %v1793
      %1840 = vmatprep.subr.bf16.mxu0 0
      %1841 = vmatpush1.bf16.xpose.msra.mxu0 %v1796
      %1842 = vmatprep.subr.bf16.mxu0 0
      %1843 = vmatpush1.bf16.xpose.msra.mxu0 %v1799
      %1844 = vmatprep.subr.bf16.mxu0 0
      %1845 = vmatpush1.bf16.xpose.msra.mxu0 %v1802
      %1846 = vmatprep.subr.bf16.mxu0 0
      %1847 = vmatpush1.bf16.xpose.msra.mxu0 %v1805
      %1848 = vmatprep.subr.bf16.mxu0 0
      %1849 = vmatpush1.bf16.xpose.msra.mxu0 %v1808
      %1850 = vmatprep.subr.bf16.mxu0 0
      %1851 = vmatpush1.bf16.xpose.msra.mxu0 %v1811
      %1852 = vmatprep.subr.bf16.mxu0 0
      %1853 = vmatpush1.bf16.xpose.msra.mxu0 %v1814
      %1854 = vmatprep.subr.bf16.mxu0 0
      %1855 = vmatpush1.bf16.xpose.msra.mxu0 %v1817
      %1856 = vmatprep.subr.bf16.mxu0 0
      %1857 = vmatpush1.bf16.xpose.msra.mxu0 %v1820
      %1858 = vmatprep.subr.bf16.mxu0 0
      %1859 = vmatpush1.bf16.xpose.msra.mxu0 %v1823
      %1860 = vmatprep.subr.bf16.mxu0 0
      %1861 = vmatpush1.bf16.xpose.msra.mxu0 %v1826
      %1862 = vmatprep.subr.bf16.mxu0 0
      %1863 = vmatpush1.bf16.xpose.msra.mxu0 %v1829
      %1864 = vmatprep.subr.bf16.mxu0 0
      %1865 = vmatpush1.bf16.xpose.msra.mxu0 %v1832
      %1866 = vmatprep.mubr.bf16.mxu0 0
      %1867 = vmatmul.mubr.bf16.gmra.mrb[0].mxu0 %v1784
      %v1868 = vpop.f32.mrb[0].mxu0
      %v1869 = vadd.f32 0.0, %v1868
      %v1870 = vpop.f32.mrb[0].mxu0
      %v1871 = vadd.f32 0.0, %v1870
      %v1872 = vpop.f32.mrb[0].mxu0
      %v1873 = vpop.f32.mrb[0].mxu0
      %1874 = vdwg.mxu0
      %v1875 = vadd.f32 %v1299, %v1869
      %v1876 = vadd.f32 %v1300, %v1871
      %v1877 = vld [vmem:[%s1092] sm:$0xe]
      %v1878 = vld [vmem:[%s1092 + $0xc] sm:$0xe]
      %v1879 = vld [vmem:[%s1092 + $0x18] sm:$0xe]
      %v1880 = vld [vmem:[%s1092 + $0x24] sm:$0xe]
      %v1881 = vld [vmem:[%s1092 + $0x30] sm:$0xe]
      %v1882 = vld [vmem:[%s1092 + $0x3c] sm:$0xe]
      %v1883 = vld [vmem:[%s1092 + $0x48] sm:$0xe]
      %v1884 = vld [vmem:[%s1092 + $0x54] sm:$0xe]
      %v1885 = vld [vmem:[%s1092 + $0x60] sm:$0xe]
      %v1886 = vld [vmem:[%s1092 + $0x6c] sm:$0xe]
      %v1887 = vld [vmem:[%s1092 + $0x78] sm:$0xe]
      %v1888 = vld [vmem:[%s1092 + $0x84] sm:$0xe]
      %v1889 = vld [vmem:[%s1092 + $0x90] sm:$0xe]
      %v1890 = vld [vmem:[%s1092 + $0x9c] sm:$0xe]
      %v1891 = vld [vmem:[%s1092 + $0xa8] sm:$0xe]
      %v1892 = vld [vmem:[%s1092 + $0xb4] sm:$0xe]
      %v1941 = vrot.slane %v1877, 5
      %v1942 = vrot.slane %v1941, 4
      %v1943 = vrot.slane %v1302, 5
      %v1944 = vsel %vm833, %v1942, %v1943
      %v1945 = vrot.slane %v1943, 4
      %v1946 = vrot.slane %v1303, 5
      %v1947 = vsel %vm833, %v1945, %v1946
      %v1948 = vrot.slane %v1878, 5
      %v1949 = vrot.slane %v1948, 4
      %v1950 = vrot.slane %v1305, 5
      %v1951 = vsel %vm833, %v1949, %v1950
      %v1952 = vrot.slane %v1950, 4
      %v1953 = vrot.slane %v1306, 5
      %v1954 = vsel %vm833, %v1952, %v1953
      %v1955 = vrot.slane %v1879, 5
      %v1956 = vrot.slane %v1955, 4
      %v1957 = vrot.slane %v1308, 5
      %v1958 = vsel %vm833, %v1956, %v1957
      %v1959 = vrot.slane %v1957, 4
      %v1960 = vrot.slane %v1309, 5
      %v1961 = vsel %vm833, %v1959, %v1960
      %v1962 = vrot.slane %v1880, 5
      %v1963 = vrot.slane %v1962, 4
      %v1964 = vrot.slane %v1311, 5
      %v1965 = vsel %vm833, %v1963, %v1964
      %v1966 = vrot.slane %v1964, 4
      %v1967 = vrot.slane %v1312, 5
      %v1968 = vsel %vm833, %v1966, %v1967
      %v1969 = vrot.slane %v1881, 5
      %v1970 = vrot.slane %v1969, 4
      %v1971 = vrot.slane %v1314, 5
      %v1972 = vsel %vm833, %v1970, %v1971
      %v1973 = vrot.slane %v1971, 4
      %v1974 = vrot.slane %v1315, 5
      %v1975 = vsel %vm833, %v1973, %v1974
      %v1976 = vrot.slane %v1882, 5
      %v1977 = vrot.slane %v1976, 4
      %v1978 = vrot.slane %v1317, 5
      %v1979 = vsel %vm833, %v1977, %v1978
      %v1980 = vrot.slane %v1978, 4
      %v1981 = vrot.slane %v1318, 5
      %v1982 = vsel %vm833, %v1980, %v1981
      %v1983 = vrot.slane %v1883, 5
      %v1984 = vrot.slane %v1983, 4
      %v1985 = vrot.slane %v1320, 5
      %v1986 = vsel %vm833, %v1984, %v1985
      %v1987 = vrot.slane %v1985, 4
      %v1988 = vrot.slane %v1321, 5
      %v1989 = vsel %vm833, %v1987, %v1988
      %v1990 = vrot.slane %v1884, 5
      %v1991 = vrot.slane %v1990, 4
      %v1992 = vrot.slane %v1323, 5
      %v1993 = vsel %vm833, %v1991, %v1992
      %v1994 = vrot.slane %v1992, 4
      %v1995 = vrot.slane %v1324, 5
      %v1996 = vsel %vm833, %v1994, %v1995
      %v1997 = vrot.slane %v1885, 5
      %v1998 = vrot.slane %v1997, 4
      %v1999 = vrot.slane %v1326, 5
      %v2000 = vsel %vm833, %v1998, %v1999
      %v2001 = vrot.slane %v1999, 4
      %v2002 = vrot.slane %v1327, 5
      %v2003 = vsel %vm833, %v2001, %v2002
      %v2004 = vrot.slane %v1886, 5
      %v2005 = vrot.slane %v2004, 4
      %v2006 = vrot.slane %v1329, 5
      %v2007 = vsel %vm833, %v2005, %v2006
      %v2008 = vrot.slane %v2006, 4
      %v2009 = vrot.slane %v1330, 5
      %v2010 = vsel %vm833, %v2008, %v2009
      %v2011 = vrot.slane %v1887, 5
      %v2012 = vrot.slane %v2011, 4
      %v2013 = vrot.slane %v1332, 5
      %v2014 = vsel %vm833, %v2012, %v2013
      %v2015 = vrot.slane %v2013, 4
      %v2016 = vrot.slane %v1333, 5
      %v2017 = vsel %vm833, %v2015, %v2016
      %v2018 = vrot.slane %v1888, 5
      %v2019 = vrot.slane %v2018, 4
      %v2020 = vrot.slane %v1335, 5
      %v2021 = vsel %vm833, %v2019, %v2020
      %v2022 = vrot.slane %v2020, 4
      %v2023 = vrot.slane %v1336, 5
      %v2024 = vsel %vm833, %v2022, %v2023
      %v2025 = vrot.slane %v1889, 5
      %v2026 = vrot.slane %v2025, 4
      %v2027 = vrot.slane %v1338, 5
      %v2028 = vsel %vm833, %v2026, %v2027
      %v2029 = vrot.slane %v2027, 4
      %v2030 = vrot.slane %v1339, 5
      %v2031 = vsel %vm833, %v2029, %v2030
      %v2032 = vrot.slane %v1890, 5
      %v2033 = vrot.slane %v2032, 4
      %v2034 = vrot.slane %v1341, 5
      %v2035 = vsel %vm833, %v2033, %v2034
      %v2036 = vrot.slane %v2034, 4
      %v2037 = vrot.slane %v1342, 5
      %v2038 = vsel %vm833, %v2036, %v2037
      %v2039 = vrot.slane %v1891, 5
      %v2040 = vrot.slane %v2039, 4
      %v2041 = vrot.slane %v1344, 5
      %v2042 = vsel %vm833, %v2040, %v2041
      %v2043 = vrot.slane %v2041, 4
      %v2044 = vrot.slane %v1345, 5
      %v2045 = vsel %vm833, %v2043, %v2044
      %v2046 = vrot.slane %v1892, 5
      %v2047 = vrot.slane %v2046, 4
      %v2048 = vrot.slane %v1347, 5
      %v2049 = vsel %vm833, %v2047, %v2048
      %v2050 = vrot.slane %v2048, 4
      %v2051 = vrot.slane %v1348, 5
      %v2052 = vsel %vm833, %v2050, %v2051
      %s2053 = scalar_lea.vmem %s1, 20
      %v2054 = vld [vmem:[%s2053] sm:$0xf]
      %v2055 = vunpack.c.l.b16 %v1944
      %v2056 = vunpack.c.l.b16 %v1947
      %v2057 = vunpack.c.l.b16 %v1951
      %v2058 = vunpack.c.l.b16 %v1954
      %v2059 = vunpack.c.l.b16 %v1958
      %v2060 = vunpack.c.l.b16 %v1961
      %v2061 = vunpack.c.l.b16 %v1965
      %v2062 = vunpack.c.l.b16 %v1968
      %v2063 = vunpack.c.l.b16 %v1972
      %v2064 = vunpack.c.l.b16 %v1975
      %v2065 = vunpack.c.l.b16 %v1979
      %v2066 = vunpack.c.l.b16 %v1982
      %v2067 = vunpack.c.l.b16 %v1986
      %v2068 = vunpack.c.l.b16 %v1989
      %v2069 = vunpack.c.l.b16 %v1993
      %v2070 = vunpack.c.l.b16 %v1996
      %v2071 = vunpack.c.l.b16 %v2000
      %v2072 = vunpack.c.l.b16 %v2003
      %v2073 = vunpack.c.l.b16 %v2007
      %v2074 = vunpack.c.l.b16 %v2010
      %v2075 = vunpack.c.l.b16 %v2014
      %v2076 = vunpack.c.l.b16 %v2017
      %v2077 = vunpack.c.l.b16 %v2021
      %v2078 = vunpack.c.l.b16 %v2024
      %v2079 = vunpack.c.l.b16 %v2028
      %v2080 = vunpack.c.l.b16 %v2031
      %v2081 = vunpack.c.l.b16 %v2035
      %v2082 = vunpack.c.l.b16 %v2038
      %v2083 = vunpack.c.l.b16 %v2042
      %v2084 = vunpack.c.l.b16 %v2045
      %v2085 = vunpack.c.l.b16 %v2049
      %v2086 = vunpack.c.l.b16 %v2052
      %v2087 = vpack.c.b16 %v2056, %v2055
      %v2088 = vpack.c.b16 %v2058, %v2057
      %v2089 = vpack.c.b16 %v2060, %v2059
      %v2090 = vpack.c.b16 %v2062, %v2061
      %v2091 = vpack.c.b16 %v2064, %v2063
      %v2092 = vpack.c.b16 %v2066, %v2065
      %v2093 = vpack.c.b16 %v2068, %v2067
      %v2094 = vpack.c.b16 %v2070, %v2069
      %v2095 = vpack.c.b16 %v2072, %v2071
      %v2096 = vpack.c.b16 %v2074, %v2073
      %v2097 = vpack.c.b16 %v2076, %v2075
      %v2098 = vpack.c.b16 %v2078, %v2077
      %v2099 = vpack.c.b16 %v2080, %v2079
      %v2100 = vpack.c.b16 %v2082, %v2081
      %v2101 = vpack.c.b16 %v2084, %v2083
      %v2102 = vpack.c.b16 %v2086, %v2085
      %v2104 = vsel %vm518, %v2054, 0
      %v2107 = vsel %vm518, %v2087, 0
      %v2110 = vsel %vm518, %v2088, 0
      %v2113 = vsel %vm518, %v2089, 0
      %v2116 = vsel %vm518, %v2090, 0
      %v2119 = vsel %vm518, %v2091, 0
      %v2122 = vsel %vm518, %v2092, 0
      %v2125 = vsel %vm518, %v2093, 0
      %v2128 = vsel %vm518, %v2094, 0
      %v2131 = vsel %vm518, %v2095, 0
      %v2134 = vsel %vm518, %v2096, 0
      %v2137 = vsel %vm518, %v2097, 0
      %v2140 = vsel %vm518, %v2098, 0
      %v2143 = vsel %vm518, %v2099, 0
      %v2146 = vsel %vm518, %v2100, 0
      %v2149 = vsel %vm518, %v2101, 0
      %v2152 = vsel %vm518, %v2102, 0
      %2154 = vmatprep.subr.bf16.mxu0 0
      %2155 = vmatpush1.bf16.xpose.msra.mxu0 %v2107
      %2156 = vmatprep.subr.bf16.mxu0 0
      %2157 = vmatpush1.bf16.xpose.msra.mxu0 %v2110
      %2158 = vmatprep.subr.bf16.mxu0 0
      %2159 = vmatpush1.bf16.xpose.msra.mxu0 %v2113
      %2160 = vmatprep.subr.bf16.mxu0 0
      %2161 = vmatpush1.bf16.xpose.msra.mxu0 %v2116
      %2162 = vmatprep.subr.bf16.mxu0 0
      %2163 = vmatpush1.bf16.xpose.msra.mxu0 %v2119
      %2164 = vmatprep.subr.bf16.mxu0 0
      %2165 = vmatpush1.bf16.xpose.msra.mxu0 %v2122
      %2166 = vmatprep.subr.bf16.mxu0 0
      %2167 = vmatpush1.bf16.xpose.msra.mxu0 %v2125
      %2168 = vmatprep.subr.bf16.mxu0 0
      %2169 = vmatpush1.bf16.xpose.msra.mxu0 %v2128
      %2170 = vmatprep.subr.bf16.mxu0 0
      %2171 = vmatpush1.bf16.xpose.msra.mxu0 %v2131
      %2172 = vmatprep.subr.bf16.mxu0 0
      %2173 = vmatpush1.bf16.xpose.msra.mxu0 %v2134
      %2174 = vmatprep.subr.bf16.mxu0 0
      %2175 = vmatpush1.bf16.xpose.msra.mxu0 %v2137
      %2176 = vmatprep.subr.bf16.mxu0 0
      %2177 = vmatpush1.bf16.xpose.msra.mxu0 %v2140
      %2178 = vmatprep.subr.bf16.mxu0 0
      %2179 = vmatpush1.bf16.xpose.msra.mxu0 %v2143
      %2180 = vmatprep.subr.bf16.mxu0 0
      %2181 = vmatpush1.bf16.xpose.msra.mxu0 %v2146
      %2182 = vmatprep.subr.bf16.mxu0 0
      %2183 = vmatpush1.bf16.xpose.msra.mxu0 %v2149
      %2184 = vmatprep.subr.bf16.mxu0 0
      %2185 = vmatpush1.bf16.xpose.msra.mxu0 %v2152
      %2186 = vmatprep.mubr.bf16.mxu0 0
      %2187 = vmatmul.mubr.bf16.gmra.mrb[0].mxu0 %v2104
      %v2188 = vpop.f32.mrb[0].mxu0
      %v2189 = vadd.f32 0.0, %v2188
      %v2190 = vpop.f32.mrb[0].mxu0
      %v2191 = vadd.f32 0.0, %v2190
      %v2192 = vpop.f32.mrb[0].mxu0
      %v2193 = vpop.f32.mrb[0].mxu0
      %2194 = vdwg.mxu0
      %v2195 = vadd.f32 %v1875, %v2189
      %v2196 = vadd.f32 %v1876, %v2191
      %s2197 = sadd.s32 6, %s29
      %s2198 = smul.addr %s2197, 4
      %s2199 = scalar_lea.vmem %s0, %s2198
      %v2200 = vld [vmem:[%s2199] sm:$0xf]
      %v2201 = vld [vmem:[%s2199 + $0x4] sm:$0xf]
      %v2202 = vld [vmem:[%s2199 + $0xc] sm:$0xf]
      %v2203 = vld [vmem:[%s2199 + $0x10] sm:$0xf]
      %v2204 = vld [vmem:[%s2199 + $0x18] sm:$0xf]
      %v2205 = vld [vmem:[%s2199 + $0x1c] sm:$0xf]
      %v2206 = vld [vmem:[%s2199 + $0x24] sm:$0xf]
      %v2207 = vld [vmem:[%s2199 + $0x28] sm:$0xf]
      %v2208 = vld [vmem:[%s2199 + $0x30] sm:$0xf]
      %v2209 = vld [vmem:[%s2199 + $0x34] sm:$0xf]
      %v2210 = vld [vmem:[%s2199 + $0x3c] sm:$0xf]
      %v2211 = vld [vmem:[%s2199 + $0x40] sm:$0xf]
      %v2212 = vld [vmem:[%s2199 + $0x48] sm:$0xf]
      %v2213 = vld [vmem:[%s2199 + $0x4c] sm:$0xf]
      %v2214 = vld [vmem:[%s2199 + $0x54] sm:$0xf]
      %v2215 = vld [vmem:[%s2199 + $0x58] sm:$0xf]
      %v2216 = vld [vmem:[%s2199 + $0x60] sm:$0xf]
      %v2217 = vld [vmem:[%s2199 + $0x64] sm:$0xf]
      %v2218 = vld [vmem:[%s2199 + $0x6c] sm:$0xf]
      %v2219 = vld [vmem:[%s2199 + $0x70] sm:$0xf]
      %v2220 = vld [vmem:[%s2199 + $0x78] sm:$0xf]
      %v2221 = vld [vmem:[%s2199 + $0x7c] sm:$0xf]
      %v2222 = vld [vmem:[%s2199 + $0x84] sm:$0xf]
      %v2223 = vld [vmem:[%s2199 + $0x88] sm:$0xf]
      %v2224 = vld [vmem:[%s2199 + $0x90] sm:$0xf]
      %v2225 = vld [vmem:[%s2199 + $0x94] sm:$0xf]
      %v2226 = vld [vmem:[%s2199 + $0x9c] sm:$0xf]
      %v2227 = vld [vmem:[%s2199 + $0xa0] sm:$0xf]
      %v2228 = vld [vmem:[%s2199 + $0xa8] sm:$0xf]
      %v2229 = vld [vmem:[%s2199 + $0xac] sm:$0xf]
      %v2230 = vld [vmem:[%s2199 + $0xb4] sm:$0xf]
      %v2231 = vld [vmem:[%s2199 + $0xb8] sm:$0xf]
      %s2232 = scalar_lea.vmem %s1, 24
      %v2233 = vld [vmem:[%s2232] sm:$0xf]
      %v2266 = vunpack.c.l.b16 %v2200
      %v2267 = vunpack.c.l.b16 %v2201
      %v2268 = vunpack.c.l.b16 %v2202
      %v2269 = vunpack.c.l.b16 %v2203
      %v2270 = vunpack.c.l.b16 %v2204
      %v2271 = vunpack.c.l.b16 %v2205
      %v2272 = vunpack.c.l.b16 %v2206
      %v2273 = vunpack.c.l.b16 %v2207
      %v2274 = vunpack.c.l.b16 %v2208
      %v2275 = vunpack.c.l.b16 %v2209
      %v2276 = vunpack.c.l.b16 %v2210
      %v2277 = vunpack.c.l.b16 %v2211
      %v2278 = vunpack.c.l.b16 %v2212
      %v2279 = vunpack.c.l.b16 %v2213
      %v2280 = vunpack.c.l.b16 %v2214
      %v2281 = vunpack.c.l.b16 %v2215
      %v2282 = vunpack.c.l.b16 %v2216
      %v2283 = vunpack.c.l.b16 %v2217
      %v2284 = vunpack.c.l.b16 %v2218
      %v2285 = vunpack.c.l.b16 %v2219
      %v2286 = vunpack.c.l.b16 %v2220
      %v2287 = vunpack.c.l.b16 %v2221
      %v2288 = vunpack.c.l.b16 %v2222
      %v2289 = vunpack.c.l.b16 %v2223
      %v2290 = vunpack.c.l.b16 %v2224
      %v2291 = vunpack.c.l.b16 %v2225
      %v2292 = vunpack.c.l.b16 %v2226
      %v2293 = vunpack.c.l.b16 %v2227
      %v2294 = vunpack.c.l.b16 %v2228
      %v2295 = vunpack.c.l.b16 %v2229
      %v2296 = vunpack.c.l.b16 %v2230
      %v2297 = vunpack.c.l.b16 %v2231
      %v2298 = vpack.c.b16 %v2267, %v2266
      %v2299 = vpack.c.b16 %v2269, %v2268
      %v2300 = vpack.c.b16 %v2271, %v2270
      %v2301 = vpack.c.b16 %v2273, %v2272
      %v2302 = vpack.c.b16 %v2275, %v2274
      %v2303 = vpack.c.b16 %v2277, %v2276
      %v2304 = vpack.c.b16 %v2279, %v2278
      %v2305 = vpack.c.b16 %v2281, %v2280
      %v2306 = vpack.c.b16 %v2283, %v2282
      %v2307 = vpack.c.b16 %v2285, %v2284
      %v2308 = vpack.c.b16 %v2287, %v2286
      %v2309 = vpack.c.b16 %v2289, %v2288
      %v2310 = vpack.c.b16 %v2291, %v2290
      %v2311 = vpack.c.b16 %v2293, %v2292
      %v2312 = vpack.c.b16 %v2295, %v2294
      %v2313 = vpack.c.b16 %v2297, %v2296
      %v2315 = vsel %vm518, %v2233, 0
      %v2318 = vsel %vm518, %v2298, 0
      %v2321 = vsel %vm518, %v2299, 0
      %v2324 = vsel %vm518, %v2300, 0
      %v2327 = vsel %vm518, %v2301, 0
      %v2330 = vsel %vm518, %v2302, 0
      %v2333 = vsel %vm518, %v2303, 0
      %v2336 = vsel %vm518, %v2304, 0
      %v2339 = vsel %vm518, %v2305, 0
      %v2342 = vsel %vm518, %v2306, 0
      %v2345 = vsel %vm518, %v2307, 0
      %v2348 = vsel %vm518, %v2308, 0
      %v2351 = vsel %vm518, %v2309, 0
      %v2354 = vsel %vm518, %v2310, 0
      %v2357 = vsel %vm518, %v2311, 0
      %v2360 = vsel %vm518, %v2312, 0
      %v2363 = vsel %vm518, %v2313, 0
      %2365 = vmatprep.subr.bf16.mxu0 0
      %2366 = vmatpush1.bf16.xpose.msra.mxu0 %v2318
      %2367 = vmatprep.subr.bf16.mxu0 0
      %2368 = vmatpush1.bf16.xpose.msra.mxu0 %v2321
      %2369 = vmatprep.subr.bf16.mxu0 0
      %2370 = vmatpush1.bf16.xpose.msra.mxu0 %v2324
      %2371 = vmatprep.subr.bf16.mxu0 0
      %2372 = vmatpush1.bf16.xpose.msra.mxu0 %v2327
      %2373 = vmatprep.subr.bf16.mxu0 0
      %2374 = vmatpush1.bf16.xpose.msra.mxu0 %v2330
      %2375 = vmatprep.subr.bf16.mxu0 0
      %2376 = vmatpush1.bf16.xpose.msra.mxu0 %v2333
      %2377 = vmatprep.subr.bf16.mxu0 0
      %2378 = vmatpush1.bf16.xpose.msra.mxu0 %v2336
      %2379 = vmatprep.subr.bf16.mxu0 0
      %2380 = vmatpush1.bf16.xpose.msra.mxu0 %v2339
      %2381 = vmatprep.subr.bf16.mxu0 0
      %2382 = vmatpush1.bf16.xpose.msra.mxu0 %v2342
      %2383 = vmatprep.subr.bf16.mxu0 0
      %2384 = vmatpush1.bf16.xpose.msra.mxu0 %v2345
      %2385 = vmatprep.subr.bf16.mxu0 0
      %2386 = vmatpush1.bf16.xpose.msra.mxu0 %v2348
      %2387 = vmatprep.subr.bf16.mxu0 0
      %2388 = vmatpush1.bf16.xpose.msra.mxu0 %v2351
      %2389 = vmatprep.subr.bf16.mxu0 0
      %2390 = vmatpush1.bf16.xpose.msra.mxu0 %v2354
      %2391 = vmatprep.subr.bf16.mxu0 0
      %2392 = vmatpush1.bf16.xpose.msra.mxu0 %v2357
      %2393 = vmatprep.subr.bf16.mxu0 0
      %2394 = vmatpush1.bf16.xpose.msra.mxu0 %v2360
      %2395 = vmatprep.subr.bf16.mxu0 0
      %2396 = vmatpush1.bf16.xpose.msra.mxu0 %v2363
      %2397 = vmatprep.mubr.bf16.mxu0 0
      %2398 = vmatmul.mubr.bf16.gmra.mrb[0].mxu0 %v2315
      %v2399 = vpop.f32.mrb[0].mxu0
      %v2400 = vadd.f32 0.0, %v2399
      %v2401 = vpop.f32.mrb[0].mxu0
      %v2402 = vadd.f32 0.0, %v2401
      %v2403 = vpop.f32.mrb[0].mxu0
      %v2404 = vpop.f32.mrb[0].mxu0
      %2405 = vdwg.mxu0
      %v2406 = vadd.f32 %v2195, %v2400
      %v2407 = vadd.f32 %v2196, %v2402
      %v2408 = vld [vmem:[%s2199] sm:$0xf]
      %v2409 = vld [vmem:[%s2199 + $0x4] sm:$0xf]
      %v2410 = vld [vmem:[%s2199 + $0x8] sm:$0x1]
      %v2411 = vld [vmem:[%s2199 + $0xc] sm:$0xf]
      %v2412 = vld [vmem:[%s2199 + $0x10] sm:$0xf]
      %v2413 = vld [vmem:[%s2199 + $0x14] sm:$0x1]
      %v2414 = vld [vmem:[%s2199 + $0x18] sm:$0xf]
      %v2415 = vld [vmem:[%s2199 + $0x1c] sm:$0xf]
      %v2416 = vld [vmem:[%s2199 + $0x20] sm:$0x1]
      %v2417 = vld [vmem:[%s2199 + $0x24] sm:$0xf]
      %v2418 = vld [vmem:[%s2199 + $0x28] sm:$0xf]
      %v2419 = vld [vmem:[%s2199 + $0x2c] sm:$0x1]
      %v2420 = vld [vmem:[%s2199 + $0x30] sm:$0xf]
      %v2421 = vld [vmem:[%s2199 + $0x34] sm:$0xf]
      %v2422 = vld [vmem:[%s2199 + $0x38] sm:$0x1]
      %v2423 = vld [vmem:[%s2199 + $0x3c] sm:$0xf]
      %v2424 = vld [vmem:[%s2199 + $0x40] sm:$0xf]
      %v2425 = vld [vmem:[%s2199 + $0x44] sm:$0x1]
      %v2426 = vld [vmem:[%s2199 + $0x48] sm:$0xf]
      %v2427 = vld [vmem:[%s2199 + $0x4c] sm:$0xf]
      %v2428 = vld [vmem:[%s2199 + $0x50] sm:$0x1]
      %v2429 = vld [vmem:[%s2199 + $0x54] sm:$0xf]
      %v2430 = vld [vmem:[%s2199 + $0x58] sm:$0xf]
      %v2431 = vld [vmem:[%s2199 + $0x5c] sm:$0x1]
      %v2432 = vld [vmem:[%s2199 + $0x60] sm:$0xf]
      %v2433 = vld [vmem:[%s2199 + $0x64] sm:$0xf]
      %v2434 = vld [vmem:[%s2199 + $0x68] sm:$0x1]
      %v2435 = vld [vmem:[%s2199 + $0x6c] sm:$0xf]
      %v2436 = vld [vmem:[%s2199 + $0x70] sm:$0xf]
      %v2437 = vld [vmem:[%s2199 + $0x74] sm:$0x1]
      %v2438 = vld [vmem:[%s2199 + $0x78] sm:$0xf]
      %v2439 = vld [vmem:[%s2199 + $0x7c] sm:$0xf]
      %v2440 = vld [vmem:[%s2199 + $0x80] sm:$0x1]
      %v2441 = vld [vmem:[%s2199 + $0x84] sm:$0xf]
      %v2442 = vld [vmem:[%s2199 + $0x88] sm:$0xf]
      %v2443 = vld [vmem:[%s2199 + $0x8c] sm:$0x1]
      %v2444 = vld [vmem:[%s2199 + $0x90] sm:$0xf]
      %v2445 = vld [vmem:[%s2199 + $0x94] sm:$0xf]
      %v2446 = vld [vmem:[%s2199 + $0x98] sm:$0x1]
      %v2447 = vld [vmem:[%s2199 + $0x9c] sm:$0xf]
      %v2448 = vld [vmem:[%s2199 + $0xa0] sm:$0xf]
      %v2449 = vld [vmem:[%s2199 + $0xa4] sm:$0x1]
      %v2450 = vld [vmem:[%s2199 + $0xa8] sm:$0xf]
      %v2451 = vld [vmem:[%s2199 + $0xac] sm:$0xf]
      %v2452 = vld [vmem:[%s2199 + $0xb0] sm:$0x1]
      %v2453 = vld [vmem:[%s2199 + $0xb4] sm:$0xf]
      %v2454 = vld [vmem:[%s2199 + $0xb8] sm:$0xf]
      %v2455 = vld [vmem:[%s2199 + $0xbc] sm:$0x1]
      %v2457 = vshrl.u32 %v2408, 16
      %v2459 = vrot.slane %v2457, 4
      %v2460 = vshll.u32 %v2408, 16
      %v2462 = vrot.slane %v2460, 5
      %v2463 = vor.u32 %v2459, %v2462
      %v2464 = vrot.slane %v2463, 4
      %v2466 = vshll.u32 %v2409, 16
      %v2468 = vrot.slane %v2466, 5
      %v2469 = vsel %vm83, %v2464, %v2468
      %v2470 = vshrl.u32 %v2409, 16
      %v2472 = vrot.slane %v2470, 4
      %v2473 = vor.u32 %v2472, %v2468
      %v2474 = vrot.slane %v2473, 4
      %v2476 = vshll.u32 %v2410, 16
      %v2478 = vrot.slane %v2476, 5
      %v2479 = vsel %vm83, %v2474, %v2478
      %v2481 = vshrl.u32 %v2411, 16
      %v2483 = vrot.slane %v2481, 4
      %v2484 = vshll.u32 %v2411, 16
      %v2486 = vrot.slane %v2484, 5
      %v2487 = vor.u32 %v2483, %v2486
      %v2488 = vrot.slane %v2487, 4
      %v2490 = vshll.u32 %v2412, 16
      %v2492 = vrot.slane %v2490, 5
      %v2493 = vsel %vm83, %v2488, %v2492
      %v2494 = vshrl.u32 %v2412, 16
      %v2496 = vrot.slane %v2494, 4
      %v2497 = vor.u32 %v2496, %v2492
      %v2498 = vrot.slane %v2497, 4
      %v2500 = vshll.u32 %v2413, 16
      %v2502 = vrot.slane %v2500, 5
      %v2503 = vsel %vm83, %v2498, %v2502
      %v2505 = vshrl.u32 %v2414, 16
      %v2507 = vrot.slane %v2505, 4
      %v2508 = vshll.u32 %v2414, 16
      %v2510 = vrot.slane %v2508, 5
      %v2511 = vor.u32 %v2507, %v2510
      %v2512 = vrot.slane %v2511, 4
      %v2514 = vshll.u32 %v2415, 16
      %v2516 = vrot.slane %v2514, 5
      %v2517 = vsel %vm83, %v2512, %v2516
      %v2518 = vshrl.u32 %v2415, 16
      %v2520 = vrot.slane %v2518, 4
      %v2521 = vor.u32 %v2520, %v2516
      %v2522 = vrot.slane %v2521, 4
      %v2524 = vshll.u32 %v2416, 16
      %v2526 = vrot.slane %v2524, 5
      %v2527 = vsel %vm83, %v2522, %v2526
      %v2529 = vshrl.u32 %v2417, 16
      %v2531 = vrot.slane %v2529, 4
      %v2532 = vshll.u32 %v2417, 16
      %v2534 = vrot.slane %v2532, 5
      %v2535 = vor.u32 %v2531, %v2534
      %v2536 = vrot.slane %v2535, 4
      %v2538 = vshll.u32 %v2418, 16
      %v2540 = vrot.slane %v2538, 5
      %v2541 = vsel %vm83, %v2536, %v2540
      %v2542 = vshrl.u32 %v2418, 16
      %v2544 = vrot.slane %v2542, 4
      %v2545 = vor.u32 %v2544, %v2540
      %v2546 = vrot.slane %v2545, 4
      %v2548 = vshll.u32 %v2419, 16
      %v2550 = vrot.slane %v2548, 5
      %v2551 = vsel %vm83, %v2546, %v2550
      %v2553 = vshrl.u32 %v2420, 16
      %v2555 = vrot.slane %v2553, 4
      %v2556 = vshll.u32 %v2420, 16
      %v2558 = vrot.slane %v2556, 5
      %v2559 = vor.u32 %v2555, %v2558
      %v2560 = vrot.slane %v2559, 4
      %v2562 = vshll.u32 %v2421, 16
      %v2564 = vrot.slane %v2562, 5
      %v2565 = vsel %vm83, %v2560, %v2564
      %v2566 = vshrl.u32 %v2421, 16
      %v2568 = vrot.slane %v2566, 4
      %v2569 = vor.u32 %v2568, %v2564
      %v2570 = vrot.slane %v2569, 4
      %v2572 = vshll.u32 %v2422, 16
      %v2574 = vrot.slane %v2572, 5
      %v2575 = vsel %vm83, %v2570, %v2574
      %v2577 = vshrl.u32 %v2423, 16
      %v2579 = vrot.slane %v2577, 4
      %v2580 = vshll.u32 %v2423, 16
      %v2582 = vrot.slane %v2580, 5
      %v2583 = vor.u32 %v2579, %v2582
      %v2584 = vrot.slane %v2583, 4
      %v2586 = vshll.u32 %v2424, 16
      %v2588 = vrot.slane %v2586, 5
      %v2589 = vsel %vm83, %v2584, %v2588
      %v2590 = vshrl.u32 %v2424, 16
      %v2592 = vrot.slane %v2590, 4
      %v2593 = vor.u32 %v2592, %v2588
      %v2594 = vrot.slane %v2593, 4
      %v2596 = vshll.u32 %v2425, 16
      %v2598 = vrot.slane %v2596, 5
      %v2599 = vsel %vm83, %v2594, %v2598
      %v2601 = vshrl.u32 %v2426, 16
      %v2603 = vrot.slane %v2601, 4
      %v2604 = vshll.u32 %v2426, 16
      %v2606 = vrot.slane %v2604, 5
      %v2607 = vor.u32 %v2603, %v2606
      %v2608 = vrot.slane %v2607, 4
      %v2610 = vshll.u32 %v2427, 16
      %v2612 = vrot.slane %v2610, 5
      %v2613 = vsel %vm83, %v2608, %v2612
      %v2614 = vshrl.u32 %v2427, 16
      %v2616 = vrot.slane %v2614, 4
      %v2617 = vor.u32 %v2616, %v2612
      %v2618 = vrot.slane %v2617, 4
      %v2620 = vshll.u32 %v2428, 16
      %v2622 = vrot.slane %v2620, 5
      %v2623 = vsel %vm83, %v2618, %v2622
      %v2625 = vshrl.u32 %v2429, 16
      %v2627 = vrot.slane %v2625, 4
      %v2628 = vshll.u32 %v2429, 16
      %v2630 = vrot.slane %v2628, 5
      %v2631 = vor.u32 %v2627, %v2630
      %v2632 = vrot.slane %v2631, 4
      %v2634 = vshll.u32 %v2430, 16
      %v2636 = vrot.slane %v2634, 5
      %v2637 = vsel %vm83, %v2632, %v2636
      %v2638 = vshrl.u32 %v2430, 16
      %v2640 = vrot.slane %v2638, 4
      %v2641 = vor.u32 %v2640, %v2636
      %v2642 = vrot.slane %v2641, 4
      %v2644 = vshll.u32 %v2431, 16
      %v2646 = vrot.slane %v2644, 5
      %v2647 = vsel %vm83, %v2642, %v2646
      %v2649 = vshrl.u32 %v2432, 16
      %v2651 = vrot.slane %v2649, 4
      %v2652 = vshll.u32 %v2432, 16
      %v2654 = vrot.slane %v2652, 5
      %v2655 = vor.u32 %v2651, %v2654
      %v2656 = vrot.slane %v2655, 4
      %v2658 = vshll.u32 %v2433, 16
      %v2660 = vrot.slane %v2658, 5
      %v2661 = vsel %vm83, %v2656, %v2660
      %v2662 = vshrl.u32 %v2433, 16
      %v2664 = vrot.slane %v2662, 4
      %v2665 = vor.u32 %v2664, %v2660
      %v2666 = vrot.slane %v2665, 4
      %v2668 = vshll.u32 %v2434, 16
      %v2670 = vrot.slane %v2668, 5
      %v2671 = vsel %vm83, %v2666, %v2670
      %v2673 = vshrl.u32 %v2435, 16
      %v2675 = vrot.slane %v2673, 4
      %v2676 = vshll.u32 %v2435, 16
      %v2678 = vrot.slane %v2676, 5
      %v2679 = vor.u32 %v2675, %v2678
      %v2680 = vrot.slane %v2679, 4
      %v2682 = vshll.u32 %v2436, 16
      %v2684 = vrot.slane %v2682, 5
      %v2685 = vsel %vm83, %v2680, %v2684
      %v2686 = vshrl.u32 %v2436, 16
      %v2688 = vrot.slane %v2686, 4
      %v2689 = vor.u32 %v2688, %v2684
      %v2690 = vrot.slane %v2689, 4
      %v2692 = vshll.u32 %v2437, 16
      %v2694 = vrot.slane %v2692, 5
      %v2695 = vsel %vm83, %v2690, %v2694
      %v2697 = vshrl.u32 %v2438, 16
      %v2699 = vrot.slane %v2697, 4
      %v2700 = vshll.u32 %v2438, 16
      %v2702 = vrot.slane %v2700, 5
      %v2703 = vor.u32 %v2699, %v2702
      %v2704 = vrot.slane %v2703, 4
      %v2706 = vshll.u32 %v2439, 16
      %v2708 = vrot.slane %v2706, 5
      %v2709 = vsel %vm83, %v2704, %v2708
      %v2710 = vshrl.u32 %v2439, 16
      %v2712 = vrot.slane %v2710, 4
      %v2713 = vor.u32 %v2712, %v2708
      %v2714 = vrot.slane %v2713, 4
      %v2716 = vshll.u32 %v2440, 16
      %v2718 = vrot.slane %v2716, 5
      %v2719 = vsel %vm83, %v2714, %v2718
      %v2721 = vshrl.u32 %v2441, 16
      %v2723 = vrot.slane %v2721, 4
      %v2724 = vshll.u32 %v2441, 16
      %v2726 = vrot.slane %v2724, 5
      %v2727 = vor.u32 %v2723, %v2726
      %v2728 = vrot.slane %v2727, 4
      %v2730 = vshll.u32 %v2442, 16
      %v2732 = vrot.slane %v2730, 5
      %v2733 = vsel %vm83, %v2728, %v2732
      %v2734 = vshrl.u32 %v2442, 16
      %v2736 = vrot.slane %v2734, 4
      %v2737 = vor.u32 %v2736, %v2732
      %v2738 = vrot.slane %v2737, 4
      %v2740 = vshll.u32 %v2443, 16
      %v2742 = vrot.slane %v2740, 5
      %v2743 = vsel %vm83, %v2738, %v2742
      %v2745 = vshrl.u32 %v2444, 16
      %v2747 = vrot.slane %v2745, 4
      %v2748 = vshll.u32 %v2444, 16
      %v2750 = vrot.slane %v2748, 5
      %v2751 = vor.u32 %v2747, %v2750
      %v2752 = vrot.slane %v2751, 4
      %v2754 = vshll.u32 %v2445, 16
      %v2756 = vrot.slane %v2754, 5
      %v2757 = vsel %vm83, %v2752, %v2756
      %v2758 = vshrl.u32 %v2445, 16
      %v2760 = vrot.slane %v2758, 4
      %v2761 = vor.u32 %v2760, %v2756
      %v2762 = vrot.slane %v2761, 4
      %v2764 = vshll.u32 %v2446, 16
      %v2766 = vrot.slane %v2764, 5
      %v2767 = vsel %vm83, %v2762, %v2766
      %v2769 = vshrl.u32 %v2447, 16
      %v2771 = vrot.slane %v2769, 4
      %v2772 = vshll.u32 %v2447, 16
      %v2774 = vrot.slane %v2772, 5
      %v2775 = vor.u32 %v2771, %v2774
      %v2776 = vrot.slane %v2775, 4
      %v2778 = vshll.u32 %v2448, 16
      %v2780 = vrot.slane %v2778, 5
      %v2781 = vsel %vm83, %v2776, %v2780
      %v2782 = vshrl.u32 %v2448, 16
      %v2784 = vrot.slane %v2782, 4
      %v2785 = vor.u32 %v2784, %v2780
      %v2786 = vrot.slane %v2785, 4
      %v2788 = vshll.u32 %v2449, 16
      %v2790 = vrot.slane %v2788, 5
      %v2791 = vsel %vm83, %v2786, %v2790
      %v2793 = vshrl.u32 %v2450, 16
      %v2795 = vrot.slane %v2793, 4
      %v2796 = vshll.u32 %v2450, 16
      %v2798 = vrot.slane %v2796, 5
      %v2799 = vor.u32 %v2795, %v2798
      %v2800 = vrot.slane %v2799, 4
      %v2802 = vshll.u32 %v2451, 16
      %v2804 = vrot.slane %v2802, 5
      %v2805 = vsel %vm83, %v2800, %v2804
      %v2806 = vshrl.u32 %v2451, 16
      %v2808 = vrot.slane %v2806, 4
      %v2809 = vor.u32 %v2808, %v2804
      %v2810 = vrot.slane %v2809, 4
      %v2812 = vshll.u32 %v2452, 16
      %v2814 = vrot.slane %v2812, 5
      %v2815 = vsel %vm83, %v2810, %v2814
      %v2817 = vshrl.u32 %v2453, 16
      %v2819 = vrot.slane %v2817, 4
      %v2820 = vshll.u32 %v2453, 16
      %v2822 = vrot.slane %v2820, 5
      %v2823 = vor.u32 %v2819, %v2822
      %v2824 = vrot.slane %v2823, 4
      %v2826 = vshll.u32 %v2454, 16
      %v2828 = vrot.slane %v2826, 5
      %v2829 = vsel %vm83, %v2824, %v2828
      %v2830 = vshrl.u32 %v2454, 16
      %v2832 = vrot.slane %v2830, 4
      %v2833 = vor.u32 %v2832, %v2828
      %v2834 = vrot.slane %v2833, 4
      %v2836 = vshll.u32 %v2455, 16
      %v2838 = vrot.slane %v2836, 5
      %v2839 = vsel %vm83, %v2834, %v2838
      %s2840 = scalar_lea.vmem %s1, 28
      %v2841 = vld [vmem:[%s2840] sm:$0xf]
      %v2842 = vunpack.c.l.b16 %v2469
      %v2843 = vunpack.c.l.b16 %v2479
      %v2844 = vunpack.c.l.b16 %v2493
      %v2845 = vunpack.c.l.b16 %v2503
      %v2846 = vunpack.c.l.b16 %v2517
      %v2847 = vunpack.c.l.b16 %v2527
      %v2848 = vunpack.c.l.b16 %v2541
      %v2849 = vunpack.c.l.b16 %v2551
      %v2850 = vunpack.c.l.b16 %v2565
      %v2851 = vunpack.c.l.b16 %v2575
      %v2852 = vunpack.c.l.b16 %v2589
      %v2853 = vunpack.c.l.b16 %v2599
      %v2854 = vunpack.c.l.b16 %v2613
      %v2855 = vunpack.c.l.b16 %v2623
      %v2856 = vunpack.c.l.b16 %v2637
      %v2857 = vunpack.c.l.b16 %v2647
      %v2858 = vunpack.c.l.b16 %v2661
      %v2859 = vunpack.c.l.b16 %v2671
      %v2860 = vunpack.c.l.b16 %v2685
      %v2861 = vunpack.c.l.b16 %v2695
      %v2862 = vunpack.c.l.b16 %v2709
      %v2863 = vunpack.c.l.b16 %v2719
      %v2864 = vunpack.c.l.b16 %v2733
      %v2865 = vunpack.c.l.b16 %v2743
      %v2866 = vunpack.c.l.b16 %v2757
      %v2867 = vunpack.c.l.b16 %v2767
      %v2868 = vunpack.c.l.b16 %v2781
      %v2869 = vunpack.c.l.b16 %v2791
      %v2870 = vunpack.c.l.b16 %v2805
      %v2871 = vunpack.c.l.b16 %v2815
      %v2872 = vunpack.c.l.b16 %v2829
      %v2873 = vunpack.c.l.b16 %v2839
      %v2874 = vpack.c.b16 %v2843, %v2842
      %v2875 = vpack.c.b16 %v2845, %v2844
      %v2876 = vpack.c.b16 %v2847, %v2846
      %v2877 = vpack.c.b16 %v2849, %v2848
      %v2878 = vpack.c.b16 %v2851, %v2850
      %v2879 = vpack.c.b16 %v2853, %v2852
      %v2880 = vpack.c.b16 %v2855, %v2854
      %v2881 = vpack.c.b16 %v2857, %v2856
      %v2882 = vpack.c.b16 %v2859, %v2858
      %v2883 = vpack.c.b16 %v2861, %v2860
      %v2884 = vpack.c.b16 %v2863, %v2862
      %v2885 = vpack.c.b16 %v2865, %v2864
      %v2886 = vpack.c.b16 %v2867, %v2866
      %v2887 = vpack.c.b16 %v2869, %v2868
      %v2888 = vpack.c.b16 %v2871, %v2870
      %v2889 = vpack.c.b16 %v2873, %v2872
      %v2891 = vsel %vm518, %v2841, 0
      %v2894 = vsel %vm518, %v2874, 0
      %v2897 = vsel %vm518, %v2875, 0
      %v2900 = vsel %vm518, %v2876, 0
      %v2903 = vsel %vm518, %v2877, 0
      %v2906 = vsel %vm518, %v2878, 0
      %v2909 = vsel %vm518, %v2879, 0
      %v2912 = vsel %vm518, %v2880, 0
      %v2915 = vsel %vm518, %v2881, 0
      %v2918 = vsel %vm518, %v2882, 0
      %v2921 = vsel %vm518, %v2883, 0
      %v2924 = vsel %vm518, %v2884, 0
      %v2927 = vsel %vm518, %v2885, 0
      %v2930 = vsel %vm518, %v2886, 0
      %v2933 = vsel %vm518, %v2887, 0
      %v2936 = vsel %vm518, %v2888, 0
      %v2939 = vsel %vm518, %v2889, 0
      %2941 = vmatprep.subr.bf16.mxu0 0
      %2942 = vmatpush1.bf16.xpose.msra.mxu0 %v2894
      %2943 = vmatprep.subr.bf16.mxu0 0
      %2944 = vmatpush1.bf16.xpose.msra.mxu0 %v2897
      %2945 = vmatprep.subr.bf16.mxu0 0
      %2946 = vmatpush1.bf16.xpose.msra.mxu0 %v2900
      %2947 = vmatprep.subr.bf16.mxu0 0
      %2948 = vmatpush1.bf16.xpose.msra.mxu0 %v2903
      %2949 = vmatprep.subr.bf16.mxu0 0
      %2950 = vmatpush1.bf16.xpose.msra.mxu0 %v2906
      %2951 = vmatprep.subr.bf16.mxu0 0
      %2952 = vmatpush1.bf16.xpose.msra.mxu0 %v2909
      %2953 = vmatprep.subr.bf16.mxu0 0
      %2954 = vmatpush1.bf16.xpose.msra.mxu0 %v2912
      %2955 = vmatprep.subr.bf16.mxu0 0
      %2956 = vmatpush1.bf16.xpose.msra.mxu0 %v2915
      %2957 = vmatprep.subr.bf16.mxu0 0
      %2958 = vmatpush1.bf16.xpose.msra.mxu0 %v2918
      %2959 = vmatprep.subr.bf16.mxu0 0
      %2960 = vmatpush1.bf16.xpose.msra.mxu0 %v2921
      %2961 = vmatprep.subr.bf16.mxu0 0
      %2962 = vmatpush1.bf16.xpose.msra.mxu0 %v2924
      %2963 = vmatprep.subr.bf16.mxu0 0
      %2964 = vmatpush1.bf16.xpose.msra.mxu0 %v2927
      %2965 = vmatprep.subr.bf16.mxu0 0
      %2966 = vmatpush1.bf16.xpose.msra.mxu0 %v2930
      %2967 = vmatprep.subr.bf16.mxu0 0
      %2968 = vmatpush1.bf16.xpose.msra.mxu0 %v2933
      %2969 = vmatprep.subr.bf16.mxu0 0
      %2970 = vmatpush1.bf16.xpose.msra.mxu0 %v2936
      %2971 = vmatprep.subr.bf16.mxu0 0
      %2972 = vmatpush1.bf16.xpose.msra.mxu0 %v2939
      %2973 = vmatprep.mubr.bf16.mxu0 0
      %2974 = vmatmul.mubr.bf16.gmra.mrb[0].mxu0 %v2891
      %v2975 = vpop.f32.mrb[0].mxu0
      %v2976 = vadd.f32 0.0, %v2975
      %v2977 = vpop.f32.mrb[0].mxu0
      %v2978 = vadd.f32 0.0, %v2977
      %v2979 = vpop.f32.mrb[0].mxu0
      %v2980 = vpop.f32.mrb[0].mxu0
      %2981 = vdwg.mxu0
      %v2982 = vadd.f32 %v2406, %v2976
      %v2983 = vadd.f32 %v2407, %v2978
      %v2984 = vld [vmem:[%s2199] sm:$0xe]
      %v2985 = vld [vmem:[%s2199 + $0xc] sm:$0xe]
      %v2986 = vld [vmem:[%s2199 + $0x18] sm:$0xe]
      %v2987 = vld [vmem:[%s2199 + $0x24] sm:$0xe]
      %v2988 = vld [vmem:[%s2199 + $0x30] sm:$0xe]
      %v2989 = vld [vmem:[%s2199 + $0x3c] sm:$0xe]
      %v2990 = vld [vmem:[%s2199 + $0x48] sm:$0xe]
      %v2991 = vld [vmem:[%s2199 + $0x54] sm:$0xe]
      %v2992 = vld [vmem:[%s2199 + $0x60] sm:$0xe]
      %v2993 = vld [vmem:[%s2199 + $0x6c] sm:$0xe]
      %v2994 = vld [vmem:[%s2199 + $0x78] sm:$0xe]
      %v2995 = vld [vmem:[%s2199 + $0x84] sm:$0xe]
      %v2996 = vld [vmem:[%s2199 + $0x90] sm:$0xe]
      %v2997 = vld [vmem:[%s2199 + $0x9c] sm:$0xe]
      %v2998 = vld [vmem:[%s2199 + $0xa8] sm:$0xe]
      %v2999 = vld [vmem:[%s2199 + $0xb4] sm:$0xe]
      %v3048 = vrot.slane %v2984, 5
      %v3049 = vrot.slane %v3048, 4
      %v3050 = vrot.slane %v2409, 5
      %v3051 = vsel %vm833, %v3049, %v3050
      %v3052 = vrot.slane %v3050, 4
      %v3053 = vrot.slane %v2410, 5
      %v3054 = vsel %vm833, %v3052, %v3053
      %v3055 = vrot.slane %v2985, 5
      %v3056 = vrot.slane %v3055, 4
      %v3057 = vrot.slane %v2412, 5
      %v3058 = vsel %vm833, %v3056, %v3057
      %v3059 = vrot.slane %v3057, 4
      %v3060 = vrot.slane %v2413, 5
      %v3061 = vsel %vm833, %v3059, %v3060
      %v3062 = vrot.slane %v2986, 5
      %v3063 = vrot.slane %v3062, 4
      %v3064 = vrot.slane %v2415, 5
      %v3065 = vsel %vm833, %v3063, %v3064
      %v3066 = vrot.slane %v3064, 4
      %v3067 = vrot.slane %v2416, 5
      %v3068 = vsel %vm833, %v3066, %v3067
      %v3069 = vrot.slane %v2987, 5
      %v3070 = vrot.slane %v3069, 4
      %v3071 = vrot.slane %v2418, 5
      %v3072 = vsel %vm833, %v3070, %v3071
      %v3073 = vrot.slane %v3071, 4
      %v3074 = vrot.slane %v2419, 5
      %v3075 = vsel %vm833, %v3073, %v3074
      %v3076 = vrot.slane %v2988, 5
      %v3077 = vrot.slane %v3076, 4
      %v3078 = vrot.slane %v2421, 5
      %v3079 = vsel %vm833, %v3077, %v3078
      %v3080 = vrot.slane %v3078, 4
      %v3081 = vrot.slane %v2422, 5
      %v3082 = vsel %vm833, %v3080, %v3081
      %v3083 = vrot.slane %v2989, 5
      %v3084 = vrot.slane %v3083, 4
      %v3085 = vrot.slane %v2424, 5
      %v3086 = vsel %vm833, %v3084, %v3085
      %v3087 = vrot.slane %v3085, 4
      %v3088 = vrot.slane %v2425, 5
      %v3089 = vsel %vm833, %v3087, %v3088
      %v3090 = vrot.slane %v2990, 5
      %v3091 = vrot.slane %v3090, 4
      %v3092 = vrot.slane %v2427, 5
      %v3093 = vsel %vm833, %v3091, %v3092
      %v3094 = vrot.slane %v3092, 4
      %v3095 = vrot.slane %v2428, 5
      %v3096 = vsel %vm833, %v3094, %v3095
      %v3097 = vrot.slane %v2991, 5
      %v3098 = vrot.slane %v3097, 4
      %v3099 = vrot.slane %v2430, 5
      %v3100 = vsel %vm833, %v3098, %v3099
      %v3101 = vrot.slane %v3099, 4
      %v3102 = vrot.slane %v2431, 5
      %v3103 = vsel %vm833, %v3101, %v3102
      %v3104 = vrot.slane %v2992, 5
      %v3105 = vrot.slane %v3104, 4
      %v3106 = vrot.slane %v2433, 5
      %v3107 = vsel %vm833, %v3105, %v3106
      %v3108 = vrot.slane %v3106, 4
      %v3109 = vrot.slane %v2434, 5
      %v3110 = vsel %vm833, %v3108, %v3109
      %v3111 = vrot.slane %v2993, 5
      %v3112 = vrot.slane %v3111, 4
      %v3113 = vrot.slane %v2436, 5
      %v3114 = vsel %vm833, %v3112, %v3113
      %v3115 = vrot.slane %v3113, 4
      %v3116 = vrot.slane %v2437, 5
      %v3117 = vsel %vm833, %v3115, %v3116
      %v3118 = vrot.slane %v2994, 5
      %v3119 = vrot.slane %v3118, 4
      %v3120 = vrot.slane %v2439, 5
      %v3121 = vsel %vm833, %v3119, %v3120
      %v3122 = vrot.slane %v3120, 4
      %v3123 = vrot.slane %v2440, 5
      %v3124 = vsel %vm833, %v3122, %v3123
      %v3125 = vrot.slane %v2995, 5
      %v3126 = vrot.slane %v3125, 4
      %v3127 = vrot.slane %v2442, 5
      %v3128 = vsel %vm833, %v3126, %v3127
      %v3129 = vrot.slane %v3127, 4
      %v3130 = vrot.slane %v2443, 5
      %v3131 = vsel %vm833, %v3129, %v3130
      %v3132 = vrot.slane %v2996, 5
      %v3133 = vrot.slane %v3132, 4
      %v3134 = vrot.slane %v2445, 5
      %v3135 = vsel %vm833, %v3133, %v3134
      %v3136 = vrot.slane %v3134, 4
      %v3137 = vrot.slane %v2446, 5
      %v3138 = vsel %vm833, %v3136, %v3137
      %v3139 = vrot.slane %v2997, 5
      %v3140 = vrot.slane %v3139, 4
      %v3141 = vrot.slane %v2448, 5
      %v3142 = vsel %vm833, %v3140, %v3141
      %v3143 = vrot.slane %v3141, 4
      %v3144 = vrot.slane %v2449, 5
      %v3145 = vsel %vm833, %v3143, %v3144
      %v3146 = vrot.slane %v2998, 5
      %v3147 = vrot.slane %v3146, 4
      %v3148 = vrot.slane %v2451, 5
      %v3149 = vsel %vm833, %v3147, %v3148
      %v3150 = vrot.slane %v3148, 4
      %v3151 = vrot.slane %v2452, 5
      %v3152 = vsel %vm833, %v3150, %v3151
      %v3153 = vrot.slane %v2999, 5
      %v3154 = vrot.slane %v3153, 4
      %v3155 = vrot.slane %v2454, 5
      %v3156 = vsel %vm833, %v3154, %v3155
      %v3157 = vrot.slane %v3155, 4
      %v3158 = vrot.slane %v2455, 5
      %v3159 = vsel %vm833, %v3157, %v3158
      %s3160 = scalar_lea.vmem %s1, 32
      %v3161 = vld [vmem:[%s3160] sm:$0xf]
      %v3162 = vunpack.c.l.b16 %v3051
      %v3163 = vunpack.c.l.b16 %v3054
      %v3164 = vunpack.c.l.b16 %v3058
      %v3165 = vunpack.c.l.b16 %v3061
      %v3166 = vunpack.c.l.b16 %v3065
      %v3167 = vunpack.c.l.b16 %v3068
      %v3168 = vunpack.c.l.b16 %v3072
      %v3169 = vunpack.c.l.b16 %v3075
      %v3170 = vunpack.c.l.b16 %v3079
      %v3171 = vunpack.c.l.b16 %v3082
      %v3172 = vunpack.c.l.b16 %v3086
      %v3173 = vunpack.c.l.b16 %v3089
      %v3174 = vunpack.c.l.b16 %v3093
      %v3175 = vunpack.c.l.b16 %v3096
      %v3176 = vunpack.c.l.b16 %v3100
      %v3177 = vunpack.c.l.b16 %v3103
      %v3178 = vunpack.c.l.b16 %v3107
      %v3179 = vunpack.c.l.b16 %v3110
      %v3180 = vunpack.c.l.b16 %v3114
      %v3181 = vunpack.c.l.b16 %v3117
      %v3182 = vunpack.c.l.b16 %v3121
      %v3183 = vunpack.c.l.b16 %v3124
      %v3184 = vunpack.c.l.b16 %v3128
      %v3185 = vunpack.c.l.b16 %v3131
      %v3186 = vunpack.c.l.b16 %v3135
      %v3187 = vunpack.c.l.b16 %v3138
      %v3188 = vunpack.c.l.b16 %v3142
      %v3189 = vunpack.c.l.b16 %v3145
      %v3190 = vunpack.c.l.b16 %v3149
      %v3191 = vunpack.c.l.b16 %v3152
      %v3192 = vunpack.c.l.b16 %v3156
      %v3193 = vunpack.c.l.b16 %v3159
      %v3194 = vpack.c.b16 %v3163, %v3162
      %v3195 = vpack.c.b16 %v3165, %v3164
      %v3196 = vpack.c.b16 %v3167, %v3166
      %v3197 = vpack.c.b16 %v3169, %v3168
      %v3198 = vpack.c.b16 %v3171, %v3170
      %v3199 = vpack.c.b16 %v3173, %v3172
      %v3200 = vpack.c.b16 %v3175, %v3174
      %v3201 = vpack.c.b16 %v3177, %v3176
      %v3202 = vpack.c.b16 %v3179, %v3178
      %v3203 = vpack.c.b16 %v3181, %v3180
      %v3204 = vpack.c.b16 %v3183, %v3182
      %v3205 = vpack.c.b16 %v3185, %v3184
      %v3206 = vpack.c.b16 %v3187, %v3186
      %v3207 = vpack.c.b16 %v3189, %v3188
      %v3208 = vpack.c.b16 %v3191, %v3190
      %v3209 = vpack.c.b16 %v3193, %v3192
      %v3211 = vsel %vm518, %v3161, 0
      %v3214 = vsel %vm518, %v3194, 0
      %v3217 = vsel %vm518, %v3195, 0
      %v3220 = vsel %vm518, %v3196, 0
      %v3223 = vsel %vm518, %v3197, 0
      %v3226 = vsel %vm518, %v3198, 0
      %v3229 = vsel %vm518, %v3199, 0
      %v3232 = vsel %vm518, %v3200, 0
      %v3235 = vsel %vm518, %v3201, 0
      %v3238 = vsel %vm518, %v3202, 0
      %v3241 = vsel %vm518, %v3203, 0
      %v3244 = vsel %vm518, %v3204, 0
      %v3247 = vsel %vm518, %v3205, 0
      %v3250 = vsel %vm518, %v3206, 0
      %v3253 = vsel %vm518, %v3207, 0
      %v3256 = vsel %vm518, %v3208, 0
      %v3259 = vsel %vm518, %v3209, 0
      %3261 = vmatprep.subr.bf16.mxu0 0
      %3262 = vmatpush1.bf16.xpose.msra.mxu0 %v3214
      %3263 = vmatprep.subr.bf16.mxu0 0
      %3264 = vmatpush1.bf16.xpose.msra.mxu0 %v3217
      %3265 = vmatprep.subr.bf16.mxu0 0
      %3266 = vmatpush1.bf16.xpose.msra.mxu0 %v3220
      %3267 = vmatprep.subr.bf16.mxu0 0
      %3268 = vmatpush1.bf16.xpose.msra.mxu0 %v3223
      %3269 = vmatprep.subr.bf16.mxu0 0
      %3270 = vmatpush1.bf16.xpose.msra.mxu0 %v3226
      %3271 = vmatprep.subr.bf16.mxu0 0
      %3272 = vmatpush1.bf16.xpose.msra.mxu0 %v3229
      %3273 = vmatprep.subr.bf16.mxu0 0
      %3274 = vmatpush1.bf16.xpose.msra.mxu0 %v3232
      %3275 = vmatprep.subr.bf16.mxu0 0
      %3276 = vmatpush1.bf16.xpose.msra.mxu0 %v3235
      %3277 = vmatprep.subr.bf16.mxu0 0
      %3278 = vmatpush1.bf16.xpose.msra.mxu0 %v3238
      %3279 = vmatprep.subr.bf16.mxu0 0
      %3280 = vmatpush1.bf16.xpose.msra.mxu0 %v3241
      %3281 = vmatprep.subr.bf16.mxu0 0
      %3282 = vmatpush1.bf16.xpose.msra.mxu0 %v3244
      %3283 = vmatprep.subr.bf16.mxu0 0
      %3284 = vmatpush1.bf16.xpose.msra.mxu0 %v3247
      %3285 = vmatprep.subr.bf16.mxu0 0
      %3286 = vmatpush1.bf16.xpose.msra.mxu0 %v3250
      %3287 = vmatprep.subr.bf16.mxu0 0
      %3288 = vmatpush1.bf16.xpose.msra.mxu0 %v3253
      %3289 = vmatprep.subr.bf16.mxu0 0
      %3290 = vmatpush1.bf16.xpose.msra.mxu0 %v3256
      %3291 = vmatprep.subr.bf16.mxu0 0
      %3292 = vmatpush1.bf16.xpose.msra.mxu0 %v3259
      %3293 = vmatprep.mubr.bf16.mxu0 0
      %3294 = vmatmul.mubr.bf16.gmra.mrb[0].mxu0 %v3211
      %v3295 = vpop.f32.mrb[0].mxu0
      %v3296 = vadd.f32 0.0, %v3295
      %v3297 = vpop.f32.mrb[0].mxu0
      %v3298 = vadd.f32 0.0, %v3297
      %v3299 = vpop.f32.mrb[0].mxu0
      %v3300 = vpop.f32.mrb[0].mxu0
      %3301 = vdwg.mxu0
      %v3302 = vadd.f32 %v2982, %v3296
      %v3303 = vadd.f32 %v2983, %v3298
      %3305 = vset.pattern.permute.xlu0 0
      %3306 = vperm.xlu0 %3305, %v22
      %v3307 = vpop.permute.xlu0 %3306
      %v3309 = vadd.f32 %v3302, %v3307
      %v3310 = vadd.f32 %v3303, %v3307
      %s3311 = smul.u32 %s24, 2
      %s3312 = smul.addr %s3311, 8
      %s3313 = scalar_lea.vmem [#allocation2], %s3312
      %3314 = vst [vmem:[%s3313] sm:$0xff] %v3309
      %3315 = vst [vmem:[%s3313 + $0x8] sm:$0xff] %v3310
    $region26: #{tpu_custom_call.1} parent=1 // loop_footer
      %s28 = sadd.s32 1, %s24
    $region27: #{tpu_custom_call.1} parent=1 // loop_footer_branch
      %23 = sbr.rel target = $region23
    $region28: #{tpu_custom_call.1} parent=1 // loop_exit
      _
    %v3316 = vld [vmem:[#allocation2] sm:$0xff]
    %v3317 = vld [vmem:[#allocation2 + $0x8] sm:$0xff]
    %v3318 = vld [vmem:[#allocation2 + $0x10] sm:$0xff]
    %v3319 = vld [vmem:[#allocation2 + $0x18] sm:$0xff]
    %v3320 = vld [vmem:[#allocation2 + $0x20] sm:$0xff]
    %v3321 = vld [vmem:[#allocation2 + $0x28] sm:$0xff]
    %v3322 = vld [vmem:[#allocation2 + $0x30] sm:$0xff]
    %v3323 = vld [vmem:[#allocation2 + $0x38] sm:$0xff]
    %v3324 = vld [vmem:[#allocation2 + $0x40] sm:$0xff]
    %v3325 = vld [vmem:[#allocation2 + $0x48] sm:$0xff]
    %v3326 = vld [vmem:[#allocation2 + $0x50] sm:$0xff]
    %v3327 = vld [vmem:[#allocation2 + $0x58] sm:$0xff]
    %v3328 = vld [vmem:[#allocation2 + $0x60] sm:$0xff]
    %v3329 = vld [vmem:[#allocation2 + $0x68] sm:$0xff]
    %v3330 = vld [vmem:[#allocation2 + $0x70] sm:$0xff]
    %v3331 = vld [vmem:[#allocation2 + $0x78] sm:$0xff]
    %v3332 = vadd.f32 %v3316, %v3317
    %3333 = vadd.xlane.f32.xlu0 %v3332
    %v3334 = vpop.xlane.xlu0 %3333
    %v3335 = vadd.f32 %v3318, %v3319
    %3336 = vadd.xlane.f32.xlu0 %v3335
    %v3337 = vpop.xlane.xlu0 %3336
    %v3338 = vadd.f32 %v3320, %v3321
    %3339 = vadd.xlane.f32.xlu0 %v3338
    %v3340 = vpop.xlane.xlu0 %3339
    %v3341 = vadd.f32 %v3322, %v3323
    %3342 = vadd.xlane.f32.xlu0 %v3341
    %v3343 = vpop.xlane.xlu0 %3342
    %v3344 = vadd.f32 %v3324, %v3325
    %3345 = vadd.xlane.f32.xlu0 %v3344
    %v3346 = vpop.xlane.xlu0 %3345
    %v3347 = vadd.f32 %v3326, %v3327
    %3348 = vadd.xlane.f32.xlu0 %v3347
    %v3349 = vpop.xlane.xlu0 %3348
    %v3350 = vadd.f32 %v3328, %v3329
    %3351 = vadd.xlane.f32.xlu0 %v3350
    %v3352 = vpop.xlane.xlu0 %3351
    %v3353 = vadd.f32 %v3330, %v3331
    %3354 = vadd.xlane.f32.xlu0 %v3353
    %v3355 = vpop.xlane.xlu0 %3354
    %v3356 = vadd.f32 %v3334, %v3337
    %v3357 = vadd.f32 %v3356, %v3340
    %v3358 = vadd.f32 %v3357, %v3343
    %v3359 = vadd.f32 %v3358, %v3346
    %v3360 = vadd.f32 %v3359, %v3349
    %v3361 = vadd.f32 %v3360, %v3352
    %v3362 = vadd.f32 %v3361, %v3355
    %v3363 = vmul.f32 %v3362, 0.00048828125
    %v3364 = vsub.f32 %v3316, %v3363
    %v3365 = vsub.f32 %v3317, %v3363
    %v3366 = vsub.f32 %v3318, %v3363
    %v3367 = vsub.f32 %v3319, %v3363
    %v3368 = vsub.f32 %v3320, %v3363
    %v3369 = vsub.f32 %v3321, %v3363
    %v3370 = vsub.f32 %v3322, %v3363
    %v3371 = vsub.f32 %v3323, %v3363
    %v3372 = vsub.f32 %v3324, %v3363
    %v3373 = vsub.f32 %v3325, %v3363
    %v3374 = vsub.f32 %v3326, %v3363
    %v3375 = vsub.f32 %v3327, %v3363
    %v3376 = vsub.f32 %v3328, %v3363
    %v3377 = vsub.f32 %v3329, %v3363
    %v3378 = vsub.f32 %v3330, %v3363
    %v3379 = vsub.f32 %v3331, %v3363
    %v3380 = vmul.f32 %v3364, %v3364
    %v3381 = vmul.f32 %v3365, %v3365
    %v3382 = vmul.f32 %v3366, %v3366
    %v3383 = vmul.f32 %v3367, %v3367
    %v3384 = vmul.f32 %v3368, %v3368
    %v3385 = vmul.f32 %v3369, %v3369
    %v3386 = vmul.f32 %v3370, %v3370
    %v3387 = vmul.f32 %v3371, %v3371
    %v3388 = vmul.f32 %v3372, %v3372
    %v3389 = vmul.f32 %v3373, %v3373
    %v3390 = vmul.f32 %v3374, %v3374
    %v3391 = vmul.f32 %v3375, %v3375
    %v3392 = vmul.f32 %v3376, %v3376
    %v3393 = vmul.f32 %v3377, %v3377
    %v3394 = vmul.f32 %v3378, %v3378
    %v3395 = vmul.f32 %v3379, %v3379
    %v3396 = vadd.f32 %v3380, %v3381
    %3397 = vadd.xlane.f32.xlu0 %v3396
    %v3398 = vpop.xlane.xlu0 %3397
    %v3399 = vadd.f32 %v3382, %v3383
    %3400 = vadd.xlane.f32.xlu0 %v3399
    %v3401 = vpop.xlane.xlu0 %3400
    %v3402 = vadd.f32 %v3384, %v3385
    %3403 = vadd.xlane.f32.xlu0 %v3402
    %v3404 = vpop.xlane.xlu0 %3403
    %v3405 = vadd.f32 %v3386, %v3387
    %3406 = vadd.xlane.f32.xlu0 %v3405
    %v3407 = vpop.xlane.xlu0 %3406
    %v3408 = vadd.f32 %v3388, %v3389
    %3409 = vadd.xlane.f32.xlu0 %v3408
    %v3410 = vpop.xlane.xlu0 %3409
    %v3411 = vadd.f32 %v3390, %v3391
    %3412 = vadd.xlane.f32.xlu0 %v3411
    %v3413 = vpop.xlane.xlu0 %3412
    %v3414 = vadd.f32 %v3392, %v3393
    %3415 = vadd.xlane.f32.xlu0 %v3414
    %v3416 = vpop.xlane.xlu0 %3415
    %v3417 = vadd.f32 %v3394, %v3395
    %3418 = vadd.xlane.f32.xlu0 %v3417
    %v3419 = vpop.xlane.xlu0 %3418
    %v3420 = vadd.f32 %v3398, %v3401
    %v3421 = vadd.f32 %v3420, %v3404
    %v3422 = vadd.f32 %v3421, %v3407
    %v3423 = vadd.f32 %v3422, %v3410
    %v3424 = vadd.f32 %v3423, %v3413
    %v3425 = vadd.f32 %v3424, %v3416
    %v3426 = vadd.f32 %v3425, %v3419
    %v3427 = vmul.f32 %v3426, 0.00048828125
    %v3428 = vadd.f32 %v3427, 1e-05
    %v3429 = vrsqrt.pop %v3428
    %v3430 = vld [vmem:[%s3] sm:$0xff]
    %v3431 = vmul.f32 %v3430, %v3429
    %v3432 = vld [vmem:[%s4] sm:$0xff]
    %3434 = vset.pattern.permute.xlu0 0
    %3435 = vperm.xlu0 %3434, %v3431
    %v3436 = vpop.permute.xlu0 %3435
    %v3438 = vmul.f32 %v3364, %v3436
    %v3439 = vmul.f32 %v3365, %v3436
    %3441 = vset.pattern.permute.xlu0 0
    %3442 = vperm.xlu0 %3441, %v3432
    %v3443 = vpop.permute.xlu0 %3442
    %v3445 = vadd.f32 %v3438, %v3443
    %v3446 = vadd.f32 %v3439, %v3443
    %3447 = vst [vmem:[#allocation3] sm:$0xff] %v3445
    %3448 = vst [vmem:[#allocation3 + $0x8] sm:$0xff] %v3446
    %v3449 = vmul.f32 %v3372, %v3436
    %v3450 = vmul.f32 %v3373, %v3436
    %v3451 = vadd.f32 %v3449, %v3443
    %v3452 = vadd.f32 %v3450, %v3443
    %s3453 = scalar_lea.vmem [#allocation3], 64
    %3454 = vst [vmem:[%s3453] sm:$0xff] %v3451
    %3455 = vst [vmem:[%s3453 + $0x8] sm:$0xff] %v3452
    %s3456 = scalar_lea.vmem %s3, 8
    %v3457 = vld [vmem:[%s3456] sm:$0xff]
    %v3458 = vmul.f32 %v3457, %v3429
    %s3459 = scalar_lea.vmem %s4, 8
    %v3460 = vld [vmem:[%s3459] sm:$0xff]
    %3462 = vset.pattern.permute.xlu0 0
    %3463 = vperm.xlu0 %3462, %v3458
    %v3464 = vpop.permute.xlu0 %3463
    %v3466 = vmul.f32 %v3366, %v3464
    %v3467 = vmul.f32 %v3367, %v3464
    %3469 = vset.pattern.permute.xlu0 0
    %3470 = vperm.xlu0 %3469, %v3460
    %v3471 = vpop.permute.xlu0 %3470
    %v3473 = vadd.f32 %v3466, %v3471
    %v3474 = vadd.f32 %v3467, %v3471
    %s3475 = scalar_lea.vmem [#allocation3], 16
    %3476 = vst [vmem:[%s3475] sm:$0xff] %v3473
    %3477 = vst [vmem:[%s3475 + $0x8] sm:$0xff] %v3474
    %v3478 = vmul.f32 %v3374, %v3464
    %v3479 = vmul.f32 %v3375, %v3464
    %v3480 = vadd.f32 %v3478, %v3471
    %v3481 = vadd.f32 %v3479, %v3471
    %s3482 = scalar_lea.vmem [#allocation3], 80
    %3483 = vst [vmem:[%s3482] sm:$0xff] %v3480
    %3484 = vst [vmem:[%s3482 + $0x8] sm:$0xff] %v3481
    %s3485 = scalar_lea.vmem %s3, 16
    %v3486 = vld [vmem:[%s3485] sm:$0xff]
    %v3487 = vmul.f32 %v3486, %v3429
    %s3488 = scalar_lea.vmem %s4, 16
    %v3489 = vld [vmem:[%s3488] sm:$0xff]
    %3491 = vset.pattern.permute.xlu0 0
    %3492 = vperm.xlu0 %3491, %v3487
    %v3493 = vpop.permute.xlu0 %3492
    %v3495 = vmul.f32 %v3368, %v3493
    %v3496 = vmul.f32 %v3369, %v3493
    %3498 = vset.pattern.permute.xlu0 0
    %3499 = vperm.xlu0 %3498, %v3489
    %v3500 = vpop.permute.xlu0 %3499
    %v3502 = vadd.f32 %v3495, %v3500
    %v3503 = vadd.f32 %v3496, %v3500
    %s3504 = scalar_lea.vmem [#allocation3], 32
    %3505 = vst [vmem:[%s3504] sm:$0xff] %v3502
    %3506 = vst [vmem:[%s3504 + $0x8] sm:$0xff] %v3503
    %v3507 = vmul.f32 %v3376, %v3493
    %v3508 = vmul.f32 %v3377, %v3493
    %v3509 = vadd.f32 %v3507, %v3500
    %v3510 = vadd.f32 %v3508, %v3500
    %s3511 = scalar_lea.vmem [#allocation3], 96
    %3512 = vst [vmem:[%s3511] sm:$0xff] %v3509
    %3513 = vst [vmem:[%s3511 + $0x8] sm:$0xff] %v3510
    %s3514 = scalar_lea.vmem %s3, 24
    %v3515 = vld [vmem:[%s3514] sm:$0xff]
    %v3516 = vmul.f32 %v3515, %v3429
    %s3517 = scalar_lea.vmem %s4, 24
    %v3518 = vld [vmem:[%s3517] sm:$0xff]
    %3520 = vset.pattern.permute.xlu0 0
    %3521 = vperm.xlu0 %3520, %v3516
    %v3522 = vpop.permute.xlu0 %3521
    %v3524 = vmul.f32 %v3370, %v3522
    %v3525 = vmul.f32 %v3371, %v3522
    %3527 = vset.pattern.permute.xlu0 0
    %3528 = vperm.xlu0 %3527, %v3518
    %v3529 = vpop.permute.xlu0 %3528
    %v3531 = vadd.f32 %v3524, %v3529
    %v3532 = vadd.f32 %v3525, %v3529
    %s3533 = scalar_lea.vmem [#allocation3], 48
    %3534 = vst [vmem:[%s3533] sm:$0xff] %v3531
    %3535 = vst [vmem:[%s3533 + $0x8] sm:$0xff] %v3532
    %v3536 = vmul.f32 %v3378, %v3522
    %v3537 = vmul.f32 %v3379, %v3522
    %v3538 = vadd.f32 %v3536, %v3529
    %v3539 = vadd.f32 %v3537, %v3529
    %s3540 = scalar_lea.vmem [#allocation3], 112
    %3541 = vst [vmem:[%s3540] sm:$0xff] %v3538
    %3542 = vst [vmem:[%s3540 + $0x8] sm:$0xff] %v3539
    // Predicated region
    $region29: #{tpu_custom_call.1} parent=1 // pred_check
      _
    $region30: #{tpu_custom_call.1} parent=1 // pred_check_branch
      %3544 = sbr.rel (0) target = $region32
    $region31: #{tpu_custom_call.1} parent=1 // pred_region
      %s3546 = ssub.s32 2048, 2048
      %3547 = vsyncadd [#allocation4], %s3546
      %s3548 = sshll.u32 [#allocation3], 4
      %s3549 = int_to_ptr.vmem [resolvable:$true] %s3548
      %3554 = dma.vmem_to_hbm [thread:$0]  %s3549, 2048, %s5, [#allocation4], 256, 256, 16
    $region32: #{tpu_custom_call.1} parent=1 // pred_fallthru
      _
    // Predicated region
    $region33: #{tpu_custom_call.1} parent=1 // pred_check
      _
    $region34: #{tpu_custom_call.1} parent=1 // pred_check_branch
      %3556 = sbr.rel (0) target = $region36
    $region35: #{tpu_custom_call.1} parent=1 // pred_region
      %3557 = dma.done [#allocation4], 2048
    $region36: #{tpu_custom_call.1} parent=1 // pred_fallthru
      _
    %3558 = vsyncpa [#allocation4], 1

</llo_original>
